<compile_context>
chip_gen: v5e
topology: v5e:2x2
jax: 0.10.0
libtpu: 0.0.40
codegen_flags: <defaults>
</compile_context>

<pallas_src>
import functools

import jax
import jax.numpy as jnp
from jax import lax
from jax.experimental import pallas as pl
from jax.experimental.pallas import tpu as pltpu

# ----------------------------------------------------------------------------
# Genotype (static; baked into the kernel as a Python loop)
# ----------------------------------------------------------------------------
RECURRENT = [("tanh", 0), ("relu", 1), ("sigmoid", 1), ("identity", 2)]
CONCAT = [1, 2, 3, 4]  # indices into `states` (state 0 is s0)
STEPS = len(RECURRENT)

_ACT = {
    "tanh": jnp.tanh,
    "relu": lambda v: jnp.maximum(v, 0.0),
    "sigmoid": jax.nn.sigmoid,
    "identity": lambda v: v,
}


def _build_groups(recurrent):
    """Fuse consecutive DARTS steps that share the same predecessor state into
    one wider matmul (steps 1 & 2 here) -> shorter serial matmul chain."""
    groups = []
    for i, (_, pred) in enumerate(recurrent):
        if groups and recurrent[groups[-1][0]][1] == pred:
            groups[-1].append(i)
        else:
            groups.append([i])
    return tuple(tuple(g) for g in groups)


GROUPS = _build_groups(RECURRENT)           # ((0,), (1, 2), (3,))


def _round_up(x, m):
    return (x + m - 1) // m * m


def _pad_gate_cols(a, nhid, h_pad):
    """Re-pad the trailing [c | h] (2*nhid) axis so each gate half spans h_pad lanes."""
    if h_pad == nhid:
        return a
    pad = [(0, 0)] * (a.ndim - 1) + [(0, h_pad - nhid)]
    return jnp.concatenate([jnp.pad(a[..., :nhid], pad),
                            jnp.pad(a[..., nhid:], pad)], axis=-1)


# ----------------------------------------------------------------------------
# Pallas kernel: t_blk DARTS-cell steps per grid iteration
# ----------------------------------------------------------------------------
def _darts_cell_kernel(x_ref, h0_ref, w0x_ref, w0h_ref, ws_ref, out_ref,
                       h_scr, xp_scr, *, h_pad, t_blk, mm_dtype):
    t = pl.program_id(1)

    # Initialize the carried hidden state at the first time block of each batch tile.
    @pl.when(t == 0)
    def _():
        h_scr[...] = h0_ref[...]

    # Time-invariant input projection for every timestep of this block, done up
    # front so it sits off the sequential recurrence critical path.  Weight
    # refs are loaded at each use (NOT hoisted into long-lived values): they
    # are already VMEM-resident, and hoisting would only add vreg pressure.
    for tt in range(t_blk):
        xp_scr[tt] = jnp.dot(x_ref[tt], w0x_ref[...],
                             preferred_element_type=jnp.float32)

    two_h = 2 * h_pad

    def step(tt, h):
        # s0 = h + sigmoid(c0) * (tanh(h0) - h), with [c0 | h0] = [x, h] @ W0.
        ch0 = xp_scr[tt] + jnp.dot(h.astype(mm_dtype), w0h_ref[...],
                                   preferred_element_type=jnp.float32)
        c0 = jax.nn.sigmoid(ch0[:, :h_pad])
        h0 = jnp.tanh(ch0[:, h_pad:])
        s0 = h + c0 * (h0 - h)

        states = [s0]
        for group in GROUPS:
            pred = RECURRENT[group[0]][1]
            s_prev = states[pred]
            lo = group[0] * two_h
            hi = (group[-1] + 1) * two_h
            # One matmul for all DARTS steps sharing this predecessor state.
            ch = jnp.dot(s_prev.astype(mm_dtype), ws_ref[:, lo:hi],
                         preferred_element_type=jnp.float32)
            for gi, i in enumerate(group):
                name = RECURRENT[i][0]
                base = gi * two_h
                c = jax.nn.sigmoid(ch[:, base:base + h_pad])
                hh = _ACT[name](ch[:, base + h_pad:base + two_h])
                states.append(s_prev + c * (hh - s_prev))

        acc = states[CONCAT[0]]
        for idx in CONCAT[1:]:
            acc = acc + states[idx]
        h_new = acc * (1.0 / len(CONCAT))

        out_ref[tt] = h_new                  # per-timestep output
        return h_new

    # fori_loop (not a Python unroll) bounds live ranges across timesteps.
    h_scr[...] = lax.fori_loop(0, t_blk, step, h_scr[...])


# ----------------------------------------------------------------------------
# Wrapper: DGSender.forward  (num_layers=1, dropout=0 -> no dropout applied)
# ----------------------------------------------------------------------------
def dg_sender_forward(x, params, state=None, *, matmul_dtype=jnp.bfloat16,
                      t_blk=None, batch_tile=None):
    """
    x:      [seq_len, batch, input_size]  float32
    state:  [num_layers=1, batch, hidden] float32 or None
    returns (outputs [seq_len, batch, hidden], state [1, batch, hidden])
    """
    S, B, ninp = x.shape
    w0, ws = params["W0"], params["Ws"]          # (ninp+H, 2H), (steps, H, 2H)
    nhid = ws.shape[1]

    # Layout padding: batch -> sublane multiple, hidden -> lane (128) multiple
    # so the c/h gate split is lane-aligned and stores are unmasked.
    h_pad = _round_up(nhid, 128)
    # 128 fills the MXU rows on v5e and is VMEM-safe everywhere; pass
    # batch_tile=256 on v6e (128 MiB VMEM) for better MXU fill at large batch.
    b_tile = batch_tile or min(_round_up(B, 8), 128)
    b_pad = _round_up(B, b_tile)
    t_blk = t_blk or min(8, S)
    s_pad = _round_up(S, t_blk)                  # pad time; slice afterwards

    w0x = w0[:ninp, :]                           # (ninp, 2H)
    w0h = w0[ninp:, :]                           # (H,    2H)

    # Gate-aligned, zero-padded weights.  The zero-padded ROWS are load-bearing
    # for correctness: padded lanes of the carried hidden state become nonzero
    # after the first step (sigmoid(0)=0.5 paths) and only these zero rows keep
    # them from leaking into real output lanes.  Do not change this padding.
    w0x_p = _pad_gate_cols(w0x, nhid, h_pad).astype(matmul_dtype)           # (ninp, 2*H_pad)
    w0h_p = _pad_gate_cols(jnp.pad(w0h, ((0, h_pad - nhid), (0, 0))),
                           nhid, h_pad).astype(matmul_dtype)                # (H_pad, 2*H_pad)
    ws_p = _pad_gate_cols(jnp.pad(ws, ((0, 0), (0, h_pad - nhid), (0, 0))),
                          nhid, h_pad).astype(matmul_dtype)                 # (steps, H_pad, 2*H_pad)
    # All step weights concatenated along the output axis; groups of steps that
    # share a predecessor state slice a contiguous column range -> fused matmul.
    ws_all = jnp.concatenate([ws_p[i] for i in range(STEPS)], axis=-1)      # (H_pad, steps*2*H_pad)

    # Raw x is streamed (ninp lanes) and projected inside the kernel -> no big
    # precomputed f32 xproj tensor in HBM/VMEM.
    x_p = jnp.pad(x, ((0, s_pad - S), (0, b_pad - B), (0, 0))).astype(matmul_dtype)

    if state is None:
        h0 = jnp.zeros((b_pad, h_pad), jnp.float32)
    else:
        h0 = jnp.pad(state[0].astype(jnp.float32),
                     ((0, b_pad - B), (0, h_pad - nhid)))

    # Explicit VMEM budget from the actual footprint (scoped defaults are only
    # 16/32 MiB on v5e/v6e+; the kernel's needs are computed, not guessed).
    mm_bytes = jnp.dtype(matmul_dtype).itemsize
    fp = (2 * t_blk * b_tile * ninp * mm_bytes            # x block (double-buffered)
          + 2 * b_tile * h_pad * 4                        # h0 block
          + 2 * ninp * 2 * h_pad * mm_bytes               # W0[:ninp]
          + 2 * h_pad * 2 * h_pad * mm_bytes              # W0[ninp:]
          + 2 * h_pad * 2 * h_pad * STEPS * mm_bytes      # fused Ws
          + 2 * t_blk * b_tile * h_pad * 4                # out block
          + b_tile * h_pad * 4                            # h scratch
          + t_blk * b_tile * 2 * h_pad * 4)               # xproj scratch
    vmem_limit = int(min(100 * 2**20, max(32 * 2**20, int(fp * 1.5))))

    kernel = functools.partial(_darts_cell_kernel, h_pad=h_pad, t_blk=t_blk,
                               mm_dtype=matmul_dtype)

    out_p = pl.pallas_call(
        kernel,
        out_shape=jax.ShapeDtypeStruct((s_pad, b_pad, h_pad), jnp.float32),
        grid_spec=pltpu.PrefetchScalarGridSpec(
            num_scalar_prefetch=0,
            grid=(b_pad // b_tile, s_pad // t_blk),
            in_specs=[
                pl.BlockSpec((t_blk, b_tile, ninp), lambda b, t: (t, b, 0)),      # x
                pl.BlockSpec((b_tile, h_pad), lambda b, t: (b, 0)),               # h0
                pl.BlockSpec((ninp, 2 * h_pad), lambda b, t: (0, 0)),             # W0[:ninp]
                pl.BlockSpec((h_pad, 2 * h_pad), lambda b, t: (0, 0)),            # W0[ninp:]
                pl.BlockSpec((h_pad, 2 * h_pad * STEPS), lambda b, t: (0, 0)),    # fused Ws
            ],
            out_specs=pl.BlockSpec((t_blk, b_tile, h_pad), lambda b, t: (t, b, 0)),
            scratch_shapes=[
                pltpu.VMEM((b_tile, h_pad), jnp.float32),                # carried hidden
                pltpu.VMEM((t_blk, b_tile, 2 * h_pad), jnp.float32),     # x-projection
            ],
        ),
        compiler_params=pltpu.CompilerParams(
            # batch tiles are independent (megacore-parallel on multi-TC chips);
            # time is a sequential recurrence.
            dimension_semantics=("parallel", "arbitrary"),
            vmem_limit_bytes=vmem_limit,
        ),
    )(x_p, h0, w0x_p, w0h_p, ws_all)

    outputs = out_p[:S, :B, :nhid]
    return outputs, outputs[-1][None]             # state stacked over num_layers


# ----------------------------------------------------------------------------
# Pure-JAX reference (mirrors the PyTorch module) for validation
# ----------------------------------------------------------------------------
def dg_sender_reference(x, params, state=None):
    S, B, _ = x.shape
    w0, ws = params["W0"], params["Ws"]
    nhid = ws.shape[1]
    h = jnp.zeros((B, nhid), jnp.float32) if state is None else state[0]
    outs = []
    for t in range(S):
        xh = jnp.concatenate([x[t], h], axis=-1)
        ch0 = xh @ w0
        c0 = jax.nn.sigmoid(ch0[:, :nhid])
        h0 = jnp.tanh(ch0[:, nhid:])
        s0 = h + c0 * (h0 - h)
        states = [s0]
        for i, (name, pred) in enumerate(RECURRENT):
            sp = states[pred]
            ch = sp @ ws[i]
            c = jax.nn.sigmoid(ch[:, :nhid])
            hh = _ACT[name](ch[:, nhid:])
            states.append(sp + c * (hh - sp))
        h = sum(states[i] for i in CONCAT) / len(CONCAT)
        outs.append(h)
    return jnp.stack(outs), h[None]


# ----------------------------------------------------------------------------
# Deterministic parameter init (xavier_uniform_, matching the module's final init)
# ----------------------------------------------------------------------------
def init_params(key, ninp, nhid):
    k0, k1 = jax.random.split(key)

    def xavier(k, shape):
        fan_in, fan_out = shape
        bound = (6.0 / (fan_in + fan_out)) ** 0.5
        return jax.random.uniform(k, shape, jnp.float32, -bound, bound)

    w0 = xavier(k0, (ninp + nhid, 2 * nhid))
    ws = jnp.stack([xavier(k, (nhid, 2 * nhid))
                    for k in jax.random.split(k1, STEPS)])
    return {"W0": w0, "Ws": ws}


if __name__ == "__main__":
    SEQ, BATCH, NINP, NHID = 8, 2, 16, 32

    key = jax.random.PRNGKey(0)
    kx, kp = jax.random.split(key)

    x = jax.random.normal(kx, (SEQ, BATCH, NINP), dtype=jnp.float32)
    params = init_params(kp, NINP, NHID)

    ref_out, ref_state = dg_sender_reference(x, params)

    # f32-matmul run: must match the reference closely.
    out32, st32 = jax.block_until_ready(
        dg_sender_forward(x, params, matmul_dtype=jnp.float32))
    assert out32.shape == (SEQ, BATCH, NHID)
    assert st32.shape == (1, BATCH, NHID)
    assert bool(jnp.allclose(out32, ref_out, atol=1e-4, rtol=1e-4))

    # Default (bf16 MXU operands, f32 accumulation / gating) run.
    outputs, state = jax.block_until_ready(dg_sender_forward(x, params))
    assert outputs.shape == (SEQ, BATCH, NHID)
    assert state.shape == (1, BATCH, NHID)
    assert bool(jnp.all(jnp.isfinite(outputs)))
    assert bool(jnp.allclose(outputs[-1], state[0]))
    assert float(jnp.max(jnp.abs(outputs - ref_out))) < 0.08

    # Exercise the remainder time-block (S % t_blk != 0) and batch-padding path.
    x2 = jax.random.normal(jax.random.PRNGKey(1), (11, 3, NINP), dtype=jnp.float32)
    ref2, _ = dg_sender_reference(x2, params)
    out2, st2 = jax.block_until_ready(
        dg_sender_forward(x2, params, matmul_dtype=jnp.float32))
    assert out2.shape == (11, 3, NHID)
    assert st2.shape == (1, 3, NHID)
    assert bool(jnp.allclose(out2, ref2, atol=1e-4, rtol=1e-4))

    print("KERNEL_OK")
</pallas_src>

<mosaic_0001>
module attributes {stable_mosaic.version = 11 : i64} {
  func.func @_darts_cell_kernel(%arg0: i32, %arg1: i32, %arg2: memref<8x8x16xf32, #tpu.memory_space<vmem>>, %arg3: memref<8x128xf32, #tpu.memory_space<vmem>>, %arg4: memref<16x256xf32, #tpu.memory_space<vmem>>, %arg5: memref<128x256xf32, #tpu.memory_space<vmem>>, %arg6: memref<128x1024xf32, #tpu.memory_space<vmem>>, %arg7: memref<8x8x128xf32, #tpu.memory_space<vmem>>, %arg8: memref<8x128xf32, #tpu.memory_space<vmem>>, %arg9: memref<8x8x256xf32, #tpu.memory_space<vmem>>) attributes {dimension_semantics = [#tpu.dimension_semantics<parallel>, #tpu.dimension_semantics<arbitrary>], iteration_bounds = array<i64: 1, 1>, scalar_prefetch = 0 : i64, scratch_operands = 2 : i64, tpu.core_type = #tpu.core_type<tc>, window_params = [{transform_indices = @transform_0, window_bounds = array<i64: 8, 8, 16>}, {transform_indices = @transform_1, window_bounds = array<i64: 8, 128>}, {pipeline_mode = #tpu.pipeline_mode<synchronous>, transform_indices = @transform_2, window_bounds = array<i64: 16, 256>}, {pipeline_mode = #tpu.pipeline_mode<synchronous>, transform_indices = @transform_3, window_bounds = array<i64: 128, 256>}, {pipeline_mode = #tpu.pipeline_mode<synchronous>, transform_indices = @transform_4, window_bounds = array<i64: 128, 1024>}, {transform_indices = @transform_5, window_bounds = array<i64: 8, 8, 128>}]} {
    %c0_i32 = arith.constant 0 : i32
    %0 = arith.cmpi eq, %arg1, %c0_i32 : i32
    %1 = arith.extui %0 : i1 to i32
    %c0_i32_0 = arith.constant 0 : i32
    %2 = arith.cmpi ne, %1, %c0_i32_0 : i32
    scf.if %2 {
      %c0_70 = arith.constant 0 : index
      %c0_71 = arith.constant 0 : index
      %63 = vector.load %arg3[%c0_70, %c0_71] : memref<8x128xf32, #tpu.memory_space<vmem>>, vector<8x128xf32>
      %c0_72 = arith.constant 0 : index
      %c0_73 = arith.constant 0 : index
      %64 = vector.load %arg8[%c0_72, %c0_73] : memref<8x128xf32, #tpu.memory_space<vmem>>, vector<8x128xf32>
      tpu.vector_store %arg8[%c0_72, %c0_73], %63 {strides = array<i32>} : memref<8x128xf32, #tpu.memory_space<vmem>>, vector<8x128xf32>,
    } else {
    }
    %c0 = arith.constant 0 : index
    %c0_1 = arith.constant 0 : index
    %c0_2 = arith.constant 0 : index
    %3 = vector.load %arg2[%c0, %c0_1, %c0_2] : memref<8x8x16xf32, #tpu.memory_space<vmem>>, vector<1x8x16xf32>
    %4 = vector.shape_cast %3 : vector<1x8x16xf32> to vector<8x16xf32>
    %c0_3 = arith.constant 0 : index
    %c0_4 = arith.constant 0 : index
    %5 = vector.load %arg4[%c0_3, %c0_4] : memref<16x256xf32, #tpu.memory_space<vmem>>, vector<16x256xf32>
    %cst = arith.constant dense<0.000000e+00> : vector<8x256xf32>
    %6 = tpu.matmul %4, %5, %cst {dimension_numbers = #tpu.dot_dimension_numbers<[1], [0], [0], [1], [0, 0, 1, 1], [], []>} : vector<8x16xf32>, vector<16x256xf32>, vector<8x256xf32> -> vector<8x256xf32>
    %c0_5 = arith.constant 0 : index
    %c0_6 = arith.constant 0 : index
    %c0_7 = arith.constant 0 : index
    %7 = vector.load %arg9[%c0_5, %c0_6, %c0_7] : memref<8x8x256xf32, #tpu.memory_space<vmem>>, vector<1x8x256xf32>
    %8 = vector.shape_cast %7 : vector<1x8x256xf32> to vector<8x256xf32>
    %9 = vector.shape_cast %6 : vector<8x256xf32> to vector<1x8x256xf32>
    tpu.vector_store %arg9[%c0_5, %c0_6, %c0_7], %9 {strides = array<i32>} : memref<8x8x256xf32, #tpu.memory_space<vmem>>, vector<1x8x256xf32>,
    %c1 = arith.constant 1 : index
    %c0_8 = arith.constant 0 : index
    %c0_9 = arith.constant 0 : index
    %10 = vector.load %arg2[%c1, %c0_8, %c0_9] : memref<8x8x16xf32, #tpu.memory_space<vmem>>, vector<1x8x16xf32>
    %11 = vector.shape_cast %10 : vector<1x8x16xf32> to vector<8x16xf32>
    %c0_10 = arith.constant 0 : index
    %c0_11 = arith.constant 0 : index
    %12 = vector.load %arg4[%c0_10, %c0_11] : memref<16x256xf32, #tpu.memory_space<vmem>>, vector<16x256xf32>
    %cst_12 = arith.constant dense<0.000000e+00> : vector<8x256xf32>
    %13 = tpu.matmul %11, %12, %cst_12 {dimension_numbers = #tpu.dot_dimension_numbers<[1], [0], [0], [1], [0, 0, 1, 1], [], []>} : vector<8x16xf32>, vector<16x256xf32>, vector<8x256xf32> -> vector<8x256xf32>
    %c1_13 = arith.constant 1 : index
    %c0_14 = arith.constant 0 : index
    %c0_15 = arith.constant 0 : index
    %14 = vector.load %arg9[%c1_13, %c0_14, %c0_15] : memref<8x8x256xf32, #tpu.memory_space<vmem>>, vector<1x8x256xf32>
    %15 = vector.shape_cast %14 : vector<1x8x256xf32> to vector<8x256xf32>
    %16 = vector.shape_cast %13 : vector<8x256xf32> to vector<1x8x256xf32>
    tpu.vector_store %arg9[%c1_13, %c0_14, %c0_15], %16 {strides = array<i32>} : memref<8x8x256xf32, #tpu.memory_space<vmem>>, vector<1x8x256xf32>,
    %c2 = arith.constant 2 : index
    %c0_16 = arith.constant 0 : index
    %c0_17 = arith.constant 0 : index
    %17 = vector.load %arg2[%c2, %c0_16, %c0_17] : memref<8x8x16xf32, #tpu.memory_space<vmem>>, vector<1x8x16xf32>
    %18 = vector.shape_cast %17 : vector<1x8x16xf32> to vector<8x16xf32>
    %c0_18 = arith.constant 0 : index
    %c0_19 = arith.constant 0 : index
    %19 = vector.load %arg4[%c0_18, %c0_19] : memref<16x256xf32, #tpu.memory_space<vmem>>, vector<16x256xf32>
    %cst_20 = arith.constant dense<0.000000e+00> : vector<8x256xf32>
    %20 = tpu.matmul %18, %19, %cst_20 {dimension_numbers = #tpu.dot_dimension_numbers<[1], [0], [0], [1], [0, 0, 1, 1], [], []>} : vector<8x16xf32>, vector<16x256xf32>, vector<8x256xf32> -> vector<8x256xf32>
    %c2_21 = arith.constant 2 : index
    %c0_22 = arith.constant 0 : index
    %c0_23 = arith.constant 0 : index
    %21 = vector.load %arg9[%c2_21, %c0_22, %c0_23] : memref<8x8x256xf32, #tpu.memory_space<vmem>>, vector<1x8x256xf32>
    %22 = vector.shape_cast %21 : vector<1x8x256xf32> to vector<8x256xf32>
    %23 = vector.shape_cast %20 : vector<8x256xf32> to vector<1x8x256xf32>
    tpu.vector_store %arg9[%c2_21, %c0_22, %c0_23], %23 {strides = array<i32>} : memref<8x8x256xf32, #tpu.memory_space<vmem>>, vector<1x8x256xf32>,
    %c3 = arith.constant 3 : index
    %c0_24 = arith.constant 0 : index
    %c0_25 = arith.constant 0 : index
    %24 = vector.load %arg2[%c3, %c0_24, %c0_25] : memref<8x8x16xf32, #tpu.memory_space<vmem>>, vector<1x8x16xf32>
    %25 = vector.shape_cast %24 : vector<1x8x16xf32> to vector<8x16xf32>
    %c0_26 = arith.constant 0 : index
    %c0_27 = arith.constant 0 : index
    %26 = vector.load %arg4[%c0_26, %c0_27] : memref<16x256xf32, #tpu.memory_space<vmem>>, vector<16x256xf32>
    %cst_28 = arith.constant dense<0.000000e+00> : vector<8x256xf32>
    %27 = tpu.matmul %25, %26, %cst_28 {dimension_numbers = #tpu.dot_dimension_numbers<[1], [0], [0], [1], [0, 0, 1, 1], [], []>} : vector<8x16xf32>, vector<16x256xf32>, vector<8x256xf32> -> vector<8x256xf32>
    %c3_29 = arith.constant 3 : index
    %c0_30 = arith.constant 0 : index
    %c0_31 = arith.constant 0 : index
    %28 = vector.load %arg9[%c3_29, %c0_30, %c0_31] : memref<8x8x256xf32, #tpu.memory_space<vmem>>, vector<1x8x256xf32>
    %29 = vector.shape_cast %28 : vector<1x8x256xf32> to vector<8x256xf32>
    %30 = vector.shape_cast %27 : vector<8x256xf32> to vector<1x8x256xf32>
    tpu.vector_store %arg9[%c3_29, %c0_30, %c0_31], %30 {strides = array<i32>} : memref<8x8x256xf32, #tpu.memory_space<vmem>>, vector<1x8x256xf32>,
    %c4 = arith.constant 4 : index
    %c0_32 = arith.constant 0 : index
    %c0_33 = arith.constant 0 : index
    %31 = vector.load %arg2[%c4, %c0_32, %c0_33] : memref<8x8x16xf32, #tpu.memory_space<vmem>>, vector<1x8x16xf32>
    %32 = vector.shape_cast %31 : vector<1x8x16xf32> to vector<8x16xf32>
    %c0_34 = arith.constant 0 : index
    %c0_35 = arith.constant 0 : index
    %33 = vector.load %arg4[%c0_34, %c0_35] : memref<16x256xf32, #tpu.memory_space<vmem>>, vector<16x256xf32>
    %cst_36 = arith.constant dense<0.000000e+00> : vector<8x256xf32>
    %34 = tpu.matmul %32, %33, %cst_36 {dimension_numbers = #tpu.dot_dimension_numbers<[1], [0], [0], [1], [0, 0, 1, 1], [], []>} : vector<8x16xf32>, vector<16x256xf32>, vector<8x256xf32> -> vector<8x256xf32>
    %c4_37 = arith.constant 4 : index
    %c0_38 = arith.constant 0 : index
    %c0_39 = arith.constant 0 : index
    %35 = vector.load %arg9[%c4_37, %c0_38, %c0_39] : memref<8x8x256xf32, #tpu.memory_space<vmem>>, vector<1x8x256xf32>
    %36 = vector.shape_cast %35 : vector<1x8x256xf32> to vector<8x256xf32>
    %37 = vector.shape_cast %34 : vector<8x256xf32> to vector<1x8x256xf32>
    tpu.vector_store %arg9[%c4_37, %c0_38, %c0_39], %37 {strides = array<i32>} : memref<8x8x256xf32, #tpu.memory_space<vmem>>, vector<1x8x256xf32>,
    %c5 = arith.constant 5 : index
    %c0_40 = arith.constant 0 : index
    %c0_41 = arith.constant 0 : index
    %38 = vector.load %arg2[%c5, %c0_40, %c0_41] : memref<8x8x16xf32, #tpu.memory_space<vmem>>, vector<1x8x16xf32>
    %39 = vector.shape_cast %38 : vector<1x8x16xf32> to vector<8x16xf32>
    %c0_42 = arith.constant 0 : index
    %c0_43 = arith.constant 0 : index
    %40 = vector.load %arg4[%c0_42, %c0_43] : memref<16x256xf32, #tpu.memory_space<vmem>>, vector<16x256xf32>
    %cst_44 = arith.constant dense<0.000000e+00> : vector<8x256xf32>
    %41 = tpu.matmul %39, %40, %cst_44 {dimension_numbers = #tpu.dot_dimension_numbers<[1], [0], [0], [1], [0, 0, 1, 1], [], []>} : vector<8x16xf32>, vector<16x256xf32>, vector<8x256xf32> -> vector<8x256xf32>
    %c5_45 = arith.constant 5 : index
    %c0_46 = arith.constant 0 : index
    %c0_47 = arith.constant 0 : index
    %42 = vector.load %arg9[%c5_45, %c0_46, %c0_47] : memref<8x8x256xf32, #tpu.memory_space<vmem>>, vector<1x8x256xf32>
    %43 = vector.shape_cast %42 : vector<1x8x256xf32> to vector<8x256xf32>
    %44 = vector.shape_cast %41 : vector<8x256xf32> to vector<1x8x256xf32>
    tpu.vector_store %arg9[%c5_45, %c0_46, %c0_47], %44 {strides = array<i32>} : memref<8x8x256xf32, #tpu.memory_space<vmem>>, vector<1x8x256xf32>,
    %c6 = arith.constant 6 : index
    %c0_48 = arith.constant 0 : index
    %c0_49 = arith.constant 0 : index
    %45 = vector.load %arg2[%c6, %c0_48, %c0_49] : memref<8x8x16xf32, #tpu.memory_space<vmem>>, vector<1x8x16xf32>
    %46 = vector.shape_cast %45 : vector<1x8x16xf32> to vector<8x16xf32>
    %c0_50 = arith.constant 0 : index
    %c0_51 = arith.constant 0 : index
    %47 = vector.load %arg4[%c0_50, %c0_51] : memref<16x256xf32, #tpu.memory_space<vmem>>, vector<16x256xf32>
    %cst_52 = arith.constant dense<0.000000e+00> : vector<8x256xf32>
    %48 = tpu.matmul %46, %47, %cst_52 {dimension_numbers = #tpu.dot_dimension_numbers<[1], [0], [0], [1], [0, 0, 1, 1], [], []>} : vector<8x16xf32>, vector<16x256xf32>, vector<8x256xf32> -> vector<8x256xf32>
    %c6_53 = arith.constant 6 : index
    %c0_54 = arith.constant 0 : index
    %c0_55 = arith.constant 0 : index
    %49 = vector.load %arg9[%c6_53, %c0_54, %c0_55] : memref<8x8x256xf32, #tpu.memory_space<vmem>>, vector<1x8x256xf32>
    %50 = vector.shape_cast %49 : vector<1x8x256xf32> to vector<8x256xf32>
    %51 = vector.shape_cast %48 : vector<8x256xf32> to vector<1x8x256xf32>
    tpu.vector_store %arg9[%c6_53, %c0_54, %c0_55], %51 {strides = array<i32>} : memref<8x8x256xf32, #tpu.memory_space<vmem>>, vector<1x8x256xf32>,
    %c7 = arith.constant 7 : index
    %c0_56 = arith.constant 0 : index
    %c0_57 = arith.constant 0 : index
    %52 = vector.load %arg2[%c7, %c0_56, %c0_57] : memref<8x8x16xf32, #tpu.memory_space<vmem>>, vector<1x8x16xf32>
    %53 = vector.shape_cast %52 : vector<1x8x16xf32> to vector<8x16xf32>
    %c0_58 = arith.constant 0 : index
    %c0_59 = arith.constant 0 : index
    %54 = vector.load %arg4[%c0_58, %c0_59] : memref<16x256xf32, #tpu.memory_space<vmem>>, vector<16x256xf32>
    %cst_60 = arith.constant dense<0.000000e+00> : vector<8x256xf32>
    %55 = tpu.matmul %53, %54, %cst_60 {dimension_numbers = #tpu.dot_dimension_numbers<[1], [0], [0], [1], [0, 0, 1, 1], [], []>} : vector<8x16xf32>, vector<16x256xf32>, vector<8x256xf32> -> vector<8x256xf32>
    %c7_61 = arith.constant 7 : index
    %c0_62 = arith.constant 0 : index
    %c0_63 = arith.constant 0 : index
    %56 = vector.load %arg9[%c7_61, %c0_62, %c0_63] : memref<8x8x256xf32, #tpu.memory_space<vmem>>, vector<1x8x256xf32>
    %57 = vector.shape_cast %56 : vector<1x8x256xf32> to vector<8x256xf32>
    %58 = vector.shape_cast %55 : vector<8x256xf32> to vector<1x8x256xf32>
    tpu.vector_store %arg9[%c7_61, %c0_62, %c0_63], %58 {strides = array<i32>} : memref<8x8x256xf32, #tpu.memory_space<vmem>>, vector<1x8x256xf32>,
    %c0_64 = arith.constant 0 : index
    %c0_65 = arith.constant 0 : index
    %59 = vector.load %arg8[%c0_64, %c0_65] : memref<8x128xf32, #tpu.memory_space<vmem>>, vector<8x128xf32>
    %c0_i32_66 = arith.constant 0 : i32
    %c8_i32 = arith.constant 8 : i32
    %60 = arith.addi %c0_i32_66, %c8_i32 : i32
    %c1_i32 = arith.constant 1 : i32
    %61 = scf.for %arg10 = %c0_i32_66 to %60 step %c1_i32 iter_args(%arg11 = %59) -> (vector<8x128xf32>)  : i32 {
      %63 = arith.index_cast %arg10 : i32 to index
      %c0_70 = arith.constant 0 : index
      %c0_71 = arith.constant 0 : index
      %64 = vector.load %arg9[%63, %c0_70, %c0_71] : memref<8x8x256xf32, #tpu.memory_space<vmem>>, vector<1x8x256xf32>
      %65 = vector.shape_cast %64 : vector<1x8x256xf32> to vector<8x256xf32>
      %c0_72 = arith.constant 0 : index
      %c0_73 = arith.constant 0 : index
      %66 = vector.load %arg5[%c0_72, %c0_73] : memref<128x256xf32, #tpu.memory_space<vmem>>, vector<128x256xf32>
      %cst_74 = arith.constant dense<0.000000e+00> : vector<8x256xf32>
      %67 = tpu.matmul %arg11, %66, %cst_74 {dimension_numbers = #tpu.dot_dimension_numbers<[1], [0], [0], [1], [0, 0, 1, 1], [], []>} : vector<8x128xf32>, vector<128x256xf32>, vector<8x256xf32> -> vector<8x256xf32>
      %68 = arith.addf %65, %67 : vector<8x256xf32>
      %69 = vector.extract_strided_slice %68 {offsets = [0, 0], sizes = [8, 128], strides = [1, 1]} : vector<8x256xf32> to vector<8x128xf32>
      %70 = arith.negf %69 : vector<8x128xf32>
      %71 = math.exp %70 : vector<8x128xf32>
      %cst_75 = arith.constant 1.000000e+00 : f32
      %72 = vector.broadcast %cst_75 : f32 to vector<8x128xf32>
      %73 = arith.addf %72, %71 : vector<8x128xf32>
      %74 = arith.divf %72, %73 : vector<8x128xf32>
      %75 = vector.extract_strided_slice %68 {offsets = [0, 128], sizes = [8, 128], strides = [1, 1]} : vector<8x256xf32> to vector<8x128xf32>
      %76 = math.tanh %75 : vector<8x128xf32>
      %77 = arith.subf %76, %arg11 : vector<8x128xf32>
      %78 = arith.mulf %74, %77 : vector<8x128xf32>
      %79 = arith.addf %arg11, %78 : vector<8x128xf32>
      %c0_76 = arith.constant 0 : index
      %c0_77 = arith.constant 0 : index
      %80 = vector.load %arg6[%c0_76, %c0_77] : memref<128x1024xf32, #tpu.memory_space<vmem>>, vector<128x256xf32>
      %cst_78 = arith.constant dense<0.000000e+00> : vector<8x256xf32>
      %81 = tpu.matmul %79, %80, %cst_78 {dimension_numbers = #tpu.dot_dimension_numbers<[1], [0], [0], [1], [0, 0, 1, 1], [], []>} : vector<8x128xf32>, vector<128x256xf32>, vector<8x256xf32> -> vector<8x256xf32>
      %82 = vector.extract_strided_slice %81 {offsets = [0, 0], sizes = [8, 128], strides = [1, 1]} : vector<8x256xf32> to vector<8x128xf32>
      %83 = arith.negf %82 : vector<8x128xf32>
      %84 = math.exp %83 : vector<8x128xf32>
      %cst_79 = arith.constant 1.000000e+00 : f32
      %85 = vector.broadcast %cst_79 : f32 to vector<8x128xf32>
      %86 = arith.addf %85, %84 : vector<8x128xf32>
      %87 = arith.divf %85, %86 : vector<8x128xf32>
      %88 = vector.extract_strided_slice %81 {offsets = [0, 128], sizes = [8, 128], strides = [1, 1]} : vector<8x256xf32> to vector<8x128xf32>
      %89 = math.tanh %88 : vector<8x128xf32>
      %90 = arith.subf %89, %79 : vector<8x128xf32>
      %91 = arith.mulf %87, %90 : vector<8x128xf32>
      %92 = arith.addf %79, %91 : vector<8x128xf32>
      %c0_80 = arith.constant 0 : index
      %c256 = arith.constant 256 : index
      %93 = vector.load %arg6[%c0_80, %c256] : memref<128x1024xf32, #tpu.memory_space<vmem>>, vector<128x512xf32>
      %cst_81 = arith.constant dense<0.000000e+00> : vector<8x512xf32>
      %94 = tpu.matmul %92, %93, %cst_81 {dimension_numbers = #tpu.dot_dimension_numbers<[1], [0], [0], [1], [0, 0, 1, 1], [], []>} : vector<8x128xf32>, vector<128x512xf32>, vector<8x512xf32> -> vector<8x512xf32>
      %95 = vector.extract_strided_slice %94 {offsets = [0, 0], sizes = [8, 128], strides = [1, 1]} : vector<8x512xf32> to vector<8x128xf32>
      %96 = arith.negf %95 : vector<8x128xf32>
      %97 = math.exp %96 : vector<8x128xf32>
      %cst_82 = arith.constant 1.000000e+00 : f32
      %98 = vector.broadcast %cst_82 : f32 to vector<8x128xf32>
      %99 = arith.addf %98, %97 : vector<8x128xf32>
      %100 = arith.divf %98, %99 : vector<8x128xf32>
      %101 = vector.extract_strided_slice %94 {offsets = [0, 128], sizes = [8, 128], strides = [1, 1]} : vector<8x512xf32> to vector<8x128xf32>
      %cst_83 = arith.constant 0.000000e+00 : f32
      %102 = vector.broadcast %cst_83 : f32 to vector<8x128xf32>
      %103 = arith.maximumf %101, %102 : vector<8x128xf32>
      %104 = arith.subf %103, %92 : vector<8x128xf32>
      %105 = arith.mulf %100, %104 : vector<8x128xf32>
      %106 = arith.addf %92, %105 : vector<8x128xf32>
      %107 = vector.extract_strided_slice %94 {offsets = [0, 256], sizes = [8, 128], strides = [1, 1]} : vector<8x512xf32> to vector<8x128xf32>
      %108 = arith.negf %107 : vector<8x128xf32>
      %109 = math.exp %108 : vector<8x128xf32>
      %cst_84 = arith.constant 1.000000e+00 : f32
      %110 = vector.broadcast %cst_84 : f32 to vector<8x128xf32>
      %111 = arith.addf %110, %109 : vector<8x128xf32>
      %112 = arith.divf %110, %111 : vector<8x128xf32>
      %113 = vector.extract_strided_slice %94 {offsets = [0, 384], sizes = [8, 128], strides = [1, 1]} : vector<8x512xf32> to vector<8x128xf32>
      %114 = arith.negf %113 : vector<8x128xf32>
      %115 = math.exp %114 : vector<8x128xf32>
      %cst_85 = arith.constant 1.000000e+00 : f32
      %116 = vector.broadcast %cst_85 : f32 to vector<8x128xf32>
      %117 = arith.addf %116, %115 : vector<8x128xf32>
      %118 = arith.divf %116, %117 : vector<8x128xf32>
      %119 = arith.subf %118, %92 : vector<8x128xf32>
      %120 = arith.mulf %112, %119 : vector<8x128xf32>
      %121 = arith.addf %92, %120 : vector<8x128xf32>
      %c0_86 = arith.constant 0 : index
      %c768 = arith.constant 768 : index
      %122 = vector.load %arg6[%c0_86, %c768] : memref<128x1024xf32, #tpu.memory_space<vmem>>, vector<128x256xf32>
      %cst_87 = arith.constant dense<0.000000e+00> : vector<8x256xf32>
      %123 = tpu.matmul %106, %122, %cst_87 {dimension_numbers = #tpu.dot_dimension_numbers<[1], [0], [0], [1], [0, 0, 1, 1], [], []>} : vector<8x128xf32>, vector<128x256xf32>, vector<8x256xf32> -> vector<8x256xf32>
      %124 = vector.extract_strided_slice %123 {offsets = [0, 0], sizes = [8, 128], strides = [1, 1]} : vector<8x256xf32> to vector<8x128xf32>
      %125 = arith.negf %124 : vector<8x128xf32>
      %126 = math.exp %125 : vector<8x128xf32>
      %cst_88 = arith.constant 1.000000e+00 : f32
      %127 = vector.broadcast %cst_88 : f32 to vector<8x128xf32>
      %128 = arith.addf %127, %126 : vector<8x128xf32>
      %129 = arith.divf %127, %128 : vector<8x128xf32>
      %130 = vector.extract_strided_slice %123 {offsets = [0, 128], sizes = [8, 128], strides = [1, 1]} : vector<8x256xf32> to vector<8x128xf32>
      %131 = arith.subf %130, %106 : vector<8x128xf32>
      %132 = arith.mulf %129, %131 : vector<8x128xf32>
      %133 = arith.addf %106, %132 : vector<8x128xf32>
      %134 = arith.addf %92, %106 : vector<8x128xf32>
      %135 = arith.addf %134, %121 : vector<8x128xf32>
      %136 = arith.addf %135, %133 : vector<8x128xf32>
      %cst_89 = arith.constant 2.500000e-01 : f32
      %137 = vector.broadcast %cst_89 : f32 to vector<8x128xf32>
      %138 = arith.mulf %136, %137 : vector<8x128xf32>
      %139 = arith.index_cast %arg10 : i32 to index
      %c0_90 = arith.constant 0 : index
      %c0_91 = arith.constant 0 : index
      %140 = vector.load %arg7[%139, %c0_90, %c0_91] : memref<8x8x128xf32, #tpu.memory_space<vmem>>, vector<1x8x128xf32>
      %141 = vector.shape_cast %140 : vector<1x8x128xf32> to vector<8x128xf32>
      %142 = vector.shape_cast %138 : vector<8x128xf32> to vector<1x8x128xf32>
      tpu.vector_store %arg7[%139, %c0_90, %c0_91], %142 {strides = array<i32>} : memref<8x8x128xf32, #tpu.memory_space<vmem>>, vector<1x8x128xf32>,
      scf.yield %138 : vector<8x128xf32>
    }
    %c8_i32_67 = arith.constant 8 : i32
    %c0_68 = arith.constant 0 : index
    %c0_69 = arith.constant 0 : index
    %62 = vector.load %arg8[%c0_68, %c0_69] : memref<8x128xf32, #tpu.memory_space<vmem>>, vector<8x128xf32>
    tpu.vector_store %arg8[%c0_68, %c0_69], %61 {strides = array<i32>} : memref<8x128xf32, #tpu.memory_space<vmem>>, vector<8x128xf32>,
    return
  }
  func.func @transform_0(%arg0: i32, %arg1: i32) -> (i32, i32, i32) {
    %c0_i32 = arith.constant 0 : i32
    %c0_i32_0 = arith.constant 0 : i32
    return %arg1, %arg0, %c0_i32 : i32, i32, i32
  }
  func.func @transform_1(%arg0: i32, %arg1: i32) -> (i32, i32) {
    %c0_i32 = arith.constant 0 : i32
    %c0_i32_0 = arith.constant 0 : i32
    return %arg0, %c0_i32 : i32, i32
  }
  func.func @transform_2(%arg0: i32, %arg1: i32) -> (i32, i32) {
    %c0_i32 = arith.constant 0 : i32
    %c0_i32_0 = arith.constant 0 : i32
    %c0_i32_1 = arith.constant 0 : i32
    return %c0_i32, %c0_i32_0 : i32, i32
  }
  func.func @transform_3(%arg0: i32, %arg1: i32) -> (i32, i32) {
    %c0_i32 = arith.constant 0 : i32
    %c0_i32_0 = arith.constant 0 : i32
    %c0_i32_1 = arith.constant 0 : i32
    return %c0_i32, %c0_i32_0 : i32, i32
  }
  func.func @transform_4(%arg0: i32, %arg1: i32) -> (i32, i32) {
    %c0_i32 = arith.constant 0 : i32
    %c0_i32_0 = arith.constant 0 : i32
    %c0_i32_1 = arith.constant 0 : i32
    return %c0_i32, %c0_i32_0 : i32, i32
  }
  func.func @transform_5(%arg0: i32, %arg1: i32) -> (i32, i32, i32) {
    %c0_i32 = arith.constant 0 : i32
    %c0_i32_0 = arith.constant 0 : i32
    return %arg1, %arg0, %c0_i32 : i32, i32, i32
  }
}

</mosaic_0001>

<llo_original>
// kernel: tpu_custom_call.1
$region0: #{tpu_custom_call.1}
  #allocation0 [shape = 'u32[]', space=smem, size = 0x4, offset = 0x4, fixed_abs, tag = 'smem constant byte address 0x4 - core index']
  #allocation1 [shape = 'u32[72,128]{1,0:T(1,128)}', space=vmem, size = 0x9000, scoped, tag = 'internal scratch']
  #allocation2 [shape = 'f32[8,128]{1,0:T(8,128)}', space=vmem, size = 0x1000, scoped, tag = 'scratch operand']
  #allocation3 [shape = 'f32[8,8,256]{2,1,0:T(8,128)}', space=vmem, size = 0x10000, scoped, tag = 'scratch operand']
  %s0 = inlined_call_operand.hbm [shape: f32[8,8,16], index: 0, kind: input, shape index: {}]
  %s1 = inlined_call_operand.hbm [shape: f32[8,128], index: 1, kind: input, shape index: {}]
  %s2 = inlined_call_operand.hbm [shape: f32[16,256], index: 2, kind: input, shape index: {}]
  %s3 = inlined_call_operand.hbm [shape: f32[128,256], index: 3, kind: input, shape index: {}]
  %s4 = inlined_call_operand.hbm [shape: f32[128,1024], index: 4, kind: input, shape index: {}]
  %s5 = inlined_call_operand.hbm [shape: f32[8,8,128], index: 5, kind: output, shape index: {}]
  %s6 = sld [smem:[#allocation0]]
  $region61: #{tpu_custom_call.1} parent=0
    _
  %s8 = ssub.s32 1, %s6
  %s9 = scalar_select 0, %s8, %s6
  $region1: #{tpu_custom_call.1} parent=0
    #allocation4 [shape = 'u8[32768]{0}', space=vmem, size = 0x8000, scoped, tag = 'input window, operand 0, single buffered']
    #allocation5 [shape = 's32[1]{0}', space=sflag, size = 0x4, scoped, tag = 'scoped memory for tpu_custom_call.1']
    #allocation6 [shape = 's32[1]{0}', space=sflag, size = 0x4, scoped, tag = 'scoped memory for tpu_custom_call.1']
    #allocation7 [shape = 'u8[4096]{0}', space=vmem, size = 0x1000, scoped, tag = 'input window, operand 1, single buffered']
    #allocation8 [shape = 's32[1]{0}', space=sflag, size = 0x4, scoped, tag = 'scoped memory for tpu_custom_call.1']
    #allocation9 [shape = 'u8[16384]{0}', space=vmem, size = 0x4000, scoped, tag = 'input window, operand 2, single buffered']
    #allocation10 [shape = 'u8[131072]{0}', space=vmem, size = 0x20000, scoped, tag = 'input window, operand 3, single buffered']
    #allocation11 [shape = 's32[1]{0}', space=sflag, size = 0x4, scoped, tag = 'scoped memory for tpu_custom_call.1']
    #allocation12 [shape = 'u8[524288]{0}', space=vmem, size = 0x80000, scoped, tag = 'input window, operand 4, single buffered']
    #allocation13 [shape = 'u8[32768]{0}', space=vmem, size = 0x8000, scoped, tag = 'output window, operand 0, single buffered']
    %10 = vsyncpa [#allocation5], 0
    %11 = vsyncpa [#allocation8], 0
    %12 = vsyncpa [#allocation11], 0
    %13 = vsyncpa [#allocation6], 0
    // Predicated region
    $region2: #{tpu_custom_call.1} parent=1 // pred_check
      _
    $region3: #{tpu_custom_call.1} parent=1 // pred_check_branch
      %15 = sbr.rel (0) target = $region5
    $region4: #{tpu_custom_call.1} parent=1 // pred_region
      %17 = vsyncadd [#allocation5], 0
      %s18 = sshll.u32 %s0, 4
      %s19 = int_to_ptr.hbm [resolvable:$true] %s18
      %s20 = sshll.u32 [#allocation4], 4
      %s21 = int_to_ptr.vmem [resolvable:$true] %s20
      %26 = dma.hbm_to_vmem [thread:$0]  %s19, 1024, %s21, [#allocation5], 128, 128, 8
    $region5: #{tpu_custom_call.1} parent=1 // pred_fallthru
      _
    // Predicated region
    $region6: #{tpu_custom_call.1} parent=1 // pred_check
      _
    $region7: #{tpu_custom_call.1} parent=1 // pred_check_branch
      %28 = sbr.rel (0) target = $region9
    $region8: #{tpu_custom_call.1} parent=1 // pred_region
      %30 = vsyncadd [#allocation8], 0
      %s32 = sshll.u32 %s1, 4
      %s33 = int_to_ptr.hbm [resolvable:$true] %s32
      %s34 = sshll.u32 [#allocation7], 4
      %s35 = int_to_ptr.vmem [resolvable:$true] %s34
      %37 = dma.hbm_to_vmem [thread:$0]  %s33, 128, %s35, [#allocation8]
    $region9: #{tpu_custom_call.1} parent=1 // pred_fallthru
      _
    // Predicated region
    $region10: #{tpu_custom_call.1} parent=1 // pred_check
      _
    $region11: #{tpu_custom_call.1} parent=1 // pred_check_branch
      %39 = sbr.rel (0) target = $region13
    $region12: #{tpu_custom_call.1} parent=1 // pred_region
      %41 = vsyncadd [#allocation8], 0
      %s42 = sshll.u32 %s2, 4
      %s43 = int_to_ptr.hbm [resolvable:$true] %s42
      %s44 = sshll.u32 [#allocation9], 4
      %s45 = int_to_ptr.vmem [resolvable:$true] %s44
      %50 = dma.hbm_to_vmem [thread:$0]  %s43, 512, %s45, [#allocation8], 256, 256, 16
    $region13: #{tpu_custom_call.1} parent=1 // pred_fallthru
      _
    // Predicated region
    $region14: #{tpu_custom_call.1} parent=1 // pred_check
      _
    $region15: #{tpu_custom_call.1} parent=1 // pred_check_branch
      %52 = sbr.rel (0) target = $region17
    $region16: #{tpu_custom_call.1} parent=1 // pred_region
      %54 = vsyncadd [#allocation11], 0
      %s55 = sshll.u32 %s3, 4
      %s56 = int_to_ptr.hbm [resolvable:$true] %s55
      %s57 = sshll.u32 [#allocation10], 4
      %s58 = int_to_ptr.vmem [resolvable:$true] %s57
      %63 = dma.hbm_to_vmem [thread:$0]  %s56, 4096, %s58, [#allocation11], 256, 256, 16
    $region17: #{tpu_custom_call.1} parent=1 // pred_fallthru
      _
    // Predicated region
    $region18: #{tpu_custom_call.1} parent=1 // pred_check
      _
    $region19: #{tpu_custom_call.1} parent=1 // pred_check_branch
      %65 = sbr.rel (0) target = $region21
    $region20: #{tpu_custom_call.1} parent=1 // pred_region
      %67 = vsyncadd [#allocation11], 0
      %s68 = sshll.u32 %s4, 4
      %s69 = int_to_ptr.hbm [resolvable:$true] %s68
      %s70 = sshll.u32 [#allocation12], 4
      %s71 = int_to_ptr.vmem [resolvable:$true] %s70
      %76 = dma.hbm_to_vmem [thread:$0]  %s69, 16384, %s71, [#allocation11], 1024, 1024, 64
    $region21: #{tpu_custom_call.1} parent=1 // pred_fallthru
      _
    // Predicated region
    $region22: #{tpu_custom_call.1} parent=1 // pred_check
      _
    $region23: #{tpu_custom_call.1} parent=1 // pred_check_branch
      %78 = sbr.rel (0) target = $region25
    $region24: #{tpu_custom_call.1} parent=1 // pred_region
      %80 = dma.done [#allocation5], 1024
    $region25: #{tpu_custom_call.1} parent=1 // pred_fallthru
      _
    // Predicated region
    $region26: #{tpu_custom_call.1} parent=1 // pred_check
      _
    $region27: #{tpu_custom_call.1} parent=1 // pred_check_branch
      %82 = sbr.rel (0) target = $region29
    $region28: #{tpu_custom_call.1} parent=1 // pred_region
      %84 = dma.done [#allocation8], 128
    $region29: #{tpu_custom_call.1} parent=1 // pred_fallthru
      _
    // Predicated region
    $region30: #{tpu_custom_call.1} parent=1 // pred_check
      _
    $region31: #{tpu_custom_call.1} parent=1 // pred_check_branch
      %86 = sbr.rel (0) target = $region33
    $region32: #{tpu_custom_call.1} parent=1 // pred_region
      %88 = dma.done [#allocation8], 512
    $region33: #{tpu_custom_call.1} parent=1 // pred_fallthru
      _
    // Predicated region
    $region34: #{tpu_custom_call.1} parent=1 // pred_check
      _
    $region35: #{tpu_custom_call.1} parent=1 // pred_check_branch
      %90 = sbr.rel (0) target = $region37
    $region36: #{tpu_custom_call.1} parent=1 // pred_region
      %92 = dma.done [#allocation11], 4096
    $region37: #{tpu_custom_call.1} parent=1 // pred_fallthru
      _
    // Predicated region
    $region38: #{tpu_custom_call.1} parent=1 // pred_check
      _
    $region39: #{tpu_custom_call.1} parent=1 // pred_check_branch
      %94 = sbr.rel (0) target = $region41
    $region40: #{tpu_custom_call.1} parent=1 // pred_region
      %96 = dma.done [#allocation11], 16384
    $region41: #{tpu_custom_call.1} parent=1 // pred_fallthru
      _
    %p97 = scmp.eq.s32.totalorder 0, 0
    // Predicated region
    $region42: #{tpu_custom_call.1} parent=1 // pred_check
      %p98 = pneg %p97
    $region43: #{tpu_custom_call.1} parent=1 // pred_check_branch
      %100 = sbr.rel (%p98) target = $region45
    $region44: #{tpu_custom_call.1} parent=1 // pred_region
      %v101 = vld [vmem:[#allocation7] sm:$0xff]
      %102 = vst [vmem:[#allocation2] sm:$0xff] %v101
    $region45: #{tpu_custom_call.1} parent=1 // pred_fallthru
      _
    %v103 = vld [vmem:[#allocation4] sm:$0xff]
    %v104 = vld [vmem:[#allocation9] sm:$0xff]
    %v105 = vld [vmem:[#allocation9 + $0x8] sm:$0xff]
    %v106 = vld [vmem:[#allocation9 + $0x10] sm:$0xff]
    %v107 = vld [vmem:[#allocation9 + $0x18] sm:$0xff]
    %vm108 = vcmask 130048
    %v110 = vsel %vm108, %v103, 0
    %112 = vmatpush.msra.mxu0 0.0
    %113 = vmatpush.msra.mxu0 0.0
    %114 = vmatpush.msra.mxu0 0.0
    %115 = vmatpush.msra.mxu0 0.0
    %116 = vmatpush.msra.mxu0 0.0
    %117 = vmatpush.msra.mxu0 0.0
    %118 = vmatpush.msra.mxu0 0.0
    %119 = vmatpush.msra.mxu0 0.0
    %120 = vmatpush.msra.mxu0 0.0
    %121 = vmatpush.msra.mxu0 0.0
    %122 = vmatpush.msra.mxu0 0.0
    %123 = vmatpush.msra.mxu0 0.0
    %124 = vmatpush.msra.mxu0 0.0
    %125 = vmatpush.msra.mxu0 0.0
    %126 = vmatpush.msra.mxu0 %v106
    %127 = vmatpush.msra.mxu0 %v104
    %128 = vmatmul.f32.gmra.mxu0 %v110
    %v129 = vpop.f32.mrf.mxu0
    %v130 = vadd.f32 0.0, %v129
    %131 = vdwg.mxu0
    %132 = vmatpush.msra.mxu0 0.0
    %133 = vmatpush.msra.mxu0 0.0
    %134 = vmatpush.msra.mxu0 0.0
    %135 = vmatpush.msra.mxu0 0.0
    %136 = vmatpush.msra.mxu0 0.0
    %137 = vmatpush.msra.mxu0 0.0
    %138 = vmatpush.msra.mxu0 0.0
    %139 = vmatpush.msra.mxu0 0.0
    %140 = vmatpush.msra.mxu0 0.0
    %141 = vmatpush.msra.mxu0 0.0
    %142 = vmatpush.msra.mxu0 0.0
    %143 = vmatpush.msra.mxu0 0.0
    %144 = vmatpush.msra.mxu0 0.0
    %145 = vmatpush.msra.mxu0 0.0
    %146 = vmatpush.msra.mxu0 %v107
    %147 = vmatpush.msra.mxu0 %v105
    %148 = vmatmul.f32.gmra.mxu0 %v110
    %v149 = vpop.f32.mrf.mxu0
    %v150 = vadd.f32 0.0, %v149
    %151 = vdwg.mxu0
    %152 = vst [vmem:[#allocation3] sm:$0xff] %v130
    %153 = vst [vmem:[#allocation3 + $0x8] sm:$0xff] %v150
    %s154 = scalar_lea.vmem [#allocation4], 8
    %v155 = vld [vmem:[%s154] sm:$0xff]
    %v156 = vld [vmem:[#allocation9] sm:$0xff]
    %v157 = vld [vmem:[#allocation9 + $0x8] sm:$0xff]
    %v158 = vld [vmem:[#allocation9 + $0x10] sm:$0xff]
    %v159 = vld [vmem:[#allocation9 + $0x18] sm:$0xff]
    %v161 = vsel %vm108, %v155, 0
    %163 = vmatpush.msra.mxu0 0.0
    %164 = vmatpush.msra.mxu0 0.0
    %165 = vmatpush.msra.mxu0 0.0
    %166 = vmatpush.msra.mxu0 0.0
    %167 = vmatpush.msra.mxu0 0.0
    %168 = vmatpush.msra.mxu0 0.0
    %169 = vmatpush.msra.mxu0 0.0
    %170 = vmatpush.msra.mxu0 0.0
    %171 = vmatpush.msra.mxu0 0.0
    %172 = vmatpush.msra.mxu0 0.0
    %173 = vmatpush.msra.mxu0 0.0
    %174 = vmatpush.msra.mxu0 0.0
    %175 = vmatpush.msra.mxu0 0.0
    %176 = vmatpush.msra.mxu0 0.0
    %177 = vmatpush.msra.mxu0 %v158
    %178 = vmatpush.msra.mxu0 %v156
    %179 = vmatmul.f32.gmra.mxu0 %v161
    %v180 = vpop.f32.mrf.mxu0
    %v181 = vadd.f32 0.0, %v180
    %182 = vdwg.mxu0
    %183 = vmatpush.msra.mxu0 0.0
    %184 = vmatpush.msra.mxu0 0.0
    %185 = vmatpush.msra.mxu0 0.0
    %186 = vmatpush.msra.mxu0 0.0
    %187 = vmatpush.msra.mxu0 0.0
    %188 = vmatpush.msra.mxu0 0.0
    %189 = vmatpush.msra.mxu0 0.0
    %190 = vmatpush.msra.mxu0 0.0
    %191 = vmatpush.msra.mxu0 0.0
    %192 = vmatpush.msra.mxu0 0.0
    %193 = vmatpush.msra.mxu0 0.0
    %194 = vmatpush.msra.mxu0 0.0
    %195 = vmatpush.msra.mxu0 0.0
    %196 = vmatpush.msra.mxu0 0.0
    %197 = vmatpush.msra.mxu0 %v159
    %198 = vmatpush.msra.mxu0 %v157
    %199 = vmatmul.f32.gmra.mxu0 %v161
    %v200 = vpop.f32.mrf.mxu0
    %v201 = vadd.f32 0.0, %v200
    %202 = vdwg.mxu0
    %s203 = scalar_lea.vmem [#allocation3], 16
    %204 = vst [vmem:[%s203] sm:$0xff] %v181
    %205 = vst [vmem:[%s203 + $0x8] sm:$0xff] %v201
    %s206 = scalar_lea.vmem [#allocation4], 16
    %v207 = vld [vmem:[%s206] sm:$0xff]
    %v208 = vld [vmem:[#allocation9] sm:$0xff]
    %v209 = vld [vmem:[#allocation9 + $0x8] sm:$0xff]
    %v210 = vld [vmem:[#allocation9 + $0x10] sm:$0xff]
    %v211 = vld [vmem:[#allocation9 + $0x18] sm:$0xff]
    %v213 = vsel %vm108, %v207, 0
    %215 = vmatpush.msra.mxu0 0.0
    %216 = vmatpush.msra.mxu0 0.0
    %217 = vmatpush.msra.mxu0 0.0
    %218 = vmatpush.msra.mxu0 0.0
    %219 = vmatpush.msra.mxu0 0.0
    %220 = vmatpush.msra.mxu0 0.0
    %221 = vmatpush.msra.mxu0 0.0
    %222 = vmatpush.msra.mxu0 0.0
    %223 = vmatpush.msra.mxu0 0.0
    %224 = vmatpush.msra.mxu0 0.0
    %225 = vmatpush.msra.mxu0 0.0
    %226 = vmatpush.msra.mxu0 0.0
    %227 = vmatpush.msra.mxu0 0.0
    %228 = vmatpush.msra.mxu0 0.0
    %229 = vmatpush.msra.mxu0 %v210
    %230 = vmatpush.msra.mxu0 %v208
    %231 = vmatmul.f32.gmra.mxu0 %v213
    %v232 = vpop.f32.mrf.mxu0
    %v233 = vadd.f32 0.0, %v232
    %234 = vdwg.mxu0
    %235 = vmatpush.msra.mxu0 0.0
    %236 = vmatpush.msra.mxu0 0.0
    %237 = vmatpush.msra.mxu0 0.0
    %238 = vmatpush.msra.mxu0 0.0
    %239 = vmatpush.msra.mxu0 0.0
    %240 = vmatpush.msra.mxu0 0.0
    %241 = vmatpush.msra.mxu0 0.0
    %242 = vmatpush.msra.mxu0 0.0
    %243 = vmatpush.msra.mxu0 0.0
    %244 = vmatpush.msra.mxu0 0.0
    %245 = vmatpush.msra.mxu0 0.0
    %246 = vmatpush.msra.mxu0 0.0
    %247 = vmatpush.msra.mxu0 0.0
    %248 = vmatpush.msra.mxu0 0.0
    %249 = vmatpush.msra.mxu0 %v211
    %250 = vmatpush.msra.mxu0 %v209
    %251 = vmatmul.f32.gmra.mxu0 %v213
    %v252 = vpop.f32.mrf.mxu0
    %v253 = vadd.f32 0.0, %v252
    %254 = vdwg.mxu0
    %s255 = scalar_lea.vmem [#allocation3], 32
    %256 = vst [vmem:[%s255] sm:$0xff] %v233
    %257 = vst [vmem:[%s255 + $0x8] sm:$0xff] %v253
    %s258 = scalar_lea.vmem [#allocation4], 24
    %v259 = vld [vmem:[%s258] sm:$0xff]
    %v260 = vld [vmem:[#allocation9] sm:$0xff]
    %v261 = vld [vmem:[#allocation9 + $0x8] sm:$0xff]
    %v262 = vld [vmem:[#allocation9 + $0x10] sm:$0xff]
    %v263 = vld [vmem:[#allocation9 + $0x18] sm:$0xff]
    %v265 = vsel %vm108, %v259, 0
    %267 = vmatpush.msra.mxu0 0.0
    %268 = vmatpush.msra.mxu0 0.0
    %269 = vmatpush.msra.mxu0 0.0
    %270 = vmatpush.msra.mxu0 0.0
    %271 = vmatpush.msra.mxu0 0.0
    %272 = vmatpush.msra.mxu0 0.0
    %273 = vmatpush.msra.mxu0 0.0
    %274 = vmatpush.msra.mxu0 0.0
    %275 = vmatpush.msra.mxu0 0.0
    %276 = vmatpush.msra.mxu0 0.0
    %277 = vmatpush.msra.mxu0 0.0
    %278 = vmatpush.msra.mxu0 0.0
    %279 = vmatpush.msra.mxu0 0.0
    %280 = vmatpush.msra.mxu0 0.0
    %281 = vmatpush.msra.mxu0 %v262
    %282 = vmatpush.msra.mxu0 %v260
    %283 = vmatmul.f32.gmra.mxu0 %v265
    %v284 = vpop.f32.mrf.mxu0
    %v285 = vadd.f32 0.0, %v284
    %286 = vdwg.mxu0
    %287 = vmatpush.msra.mxu0 0.0
    %288 = vmatpush.msra.mxu0 0.0
    %289 = vmatpush.msra.mxu0 0.0
    %290 = vmatpush.msra.mxu0 0.0
    %291 = vmatpush.msra.mxu0 0.0
    %292 = vmatpush.msra.mxu0 0.0
    %293 = vmatpush.msra.mxu0 0.0
    %294 = vmatpush.msra.mxu0 0.0
    %295 = vmatpush.msra.mxu0 0.0
    %296 = vmatpush.msra.mxu0 0.0
    %297 = vmatpush.msra.mxu0 0.0
    %298 = vmatpush.msra.mxu0 0.0
    %299 = vmatpush.msra.mxu0 0.0
    %300 = vmatpush.msra.mxu0 0.0
    %301 = vmatpush.msra.mxu0 %v263
    %302 = vmatpush.msra.mxu0 %v261
    %303 = vmatmul.f32.gmra.mxu0 %v265
    %v304 = vpop.f32.mrf.mxu0
    %v305 = vadd.f32 0.0, %v304
    %306 = vdwg.mxu0
    %s307 = scalar_lea.vmem [#allocation3], 48
    %308 = vst [vmem:[%s307] sm:$0xff] %v285
    %309 = vst [vmem:[%s307 + $0x8] sm:$0xff] %v305
    %s310 = scalar_lea.vmem [#allocation4], 32
    %v311 = vld [vmem:[%s310] sm:$0xff]
    %v312 = vld [vmem:[#allocation9] sm:$0xff]
    %v313 = vld [vmem:[#allocation9 + $0x8] sm:$0xff]
    %v314 = vld [vmem:[#allocation9 + $0x10] sm:$0xff]
    %v315 = vld [vmem:[#allocation9 + $0x18] sm:$0xff]
    %v317 = vsel %vm108, %v311, 0
    %319 = vmatpush.msra.mxu0 0.0
    %320 = vmatpush.msra.mxu0 0.0
    %321 = vmatpush.msra.mxu0 0.0
    %322 = vmatpush.msra.mxu0 0.0
    %323 = vmatpush.msra.mxu0 0.0
    %324 = vmatpush.msra.mxu0 0.0
    %325 = vmatpush.msra.mxu0 0.0
    %326 = vmatpush.msra.mxu0 0.0
    %327 = vmatpush.msra.mxu0 0.0
    %328 = vmatpush.msra.mxu0 0.0
    %329 = vmatpush.msra.mxu0 0.0
    %330 = vmatpush.msra.mxu0 0.0
    %331 = vmatpush.msra.mxu0 0.0
    %332 = vmatpush.msra.mxu0 0.0
    %333 = vmatpush.msra.mxu0 %v314
    %334 = vmatpush.msra.mxu0 %v312
    %335 = vmatmul.f32.gmra.mxu0 %v317
    %v336 = vpop.f32.mrf.mxu0
    %v337 = vadd.f32 0.0, %v336
    %338 = vdwg.mxu0
    %339 = vmatpush.msra.mxu0 0.0
    %340 = vmatpush.msra.mxu0 0.0
    %341 = vmatpush.msra.mxu0 0.0
    %342 = vmatpush.msra.mxu0 0.0
    %343 = vmatpush.msra.mxu0 0.0
    %344 = vmatpush.msra.mxu0 0.0
    %345 = vmatpush.msra.mxu0 0.0
    %346 = vmatpush.msra.mxu0 0.0
    %347 = vmatpush.msra.mxu0 0.0
    %348 = vmatpush.msra.mxu0 0.0
    %349 = vmatpush.msra.mxu0 0.0
    %350 = vmatpush.msra.mxu0 0.0
    %351 = vmatpush.msra.mxu0 0.0
    %352 = vmatpush.msra.mxu0 0.0
    %353 = vmatpush.msra.mxu0 %v315
    %354 = vmatpush.msra.mxu0 %v313
    %355 = vmatmul.f32.gmra.mxu0 %v317
    %v356 = vpop.f32.mrf.mxu0
    %v357 = vadd.f32 0.0, %v356
    %358 = vdwg.mxu0
    %s359 = scalar_lea.vmem [#allocation3], 64
    %360 = vst [vmem:[%s359] sm:$0xff] %v337
    %361 = vst [vmem:[%s359 + $0x8] sm:$0xff] %v357
    %s362 = scalar_lea.vmem [#allocation4], 40
    %v363 = vld [vmem:[%s362] sm:$0xff]
    %v364 = vld [vmem:[#allocation9] sm:$0xff]
    %v365 = vld [vmem:[#allocation9 + $0x8] sm:$0xff]
    %v366 = vld [vmem:[#allocation9 + $0x10] sm:$0xff]
    %v367 = vld [vmem:[#allocation9 + $0x18] sm:$0xff]
    %v369 = vsel %vm108, %v363, 0
    %371 = vmatpush.msra.mxu0 0.0
    %372 = vmatpush.msra.mxu0 0.0
    %373 = vmatpush.msra.mxu0 0.0
    %374 = vmatpush.msra.mxu0 0.0
    %375 = vmatpush.msra.mxu0 0.0
    %376 = vmatpush.msra.mxu0 0.0
    %377 = vmatpush.msra.mxu0 0.0
    %378 = vmatpush.msra.mxu0 0.0
    %379 = vmatpush.msra.mxu0 0.0
    %380 = vmatpush.msra.mxu0 0.0
    %381 = vmatpush.msra.mxu0 0.0
    %382 = vmatpush.msra.mxu0 0.0
    %383 = vmatpush.msra.mxu0 0.0
    %384 = vmatpush.msra.mxu0 0.0
    %385 = vmatpush.msra.mxu0 %v366
    %386 = vmatpush.msra.mxu0 %v364
    %387 = vmatmul.f32.gmra.mxu0 %v369
    %v388 = vpop.f32.mrf.mxu0
    %v389 = vadd.f32 0.0, %v388
    %390 = vdwg.mxu0
    %391 = vmatpush.msra.mxu0 0.0
    %392 = vmatpush.msra.mxu0 0.0
    %393 = vmatpush.msra.mxu0 0.0
    %394 = vmatpush.msra.mxu0 0.0
    %395 = vmatpush.msra.mxu0 0.0
    %396 = vmatpush.msra.mxu0 0.0
    %397 = vmatpush.msra.mxu0 0.0
    %398 = vmatpush.msra.mxu0 0.0
    %399 = vmatpush.msra.mxu0 0.0
    %400 = vmatpush.msra.mxu0 0.0
    %401 = vmatpush.msra.mxu0 0.0
    %402 = vmatpush.msra.mxu0 0.0
    %403 = vmatpush.msra.mxu0 0.0
    %404 = vmatpush.msra.mxu0 0.0
    %405 = vmatpush.msra.mxu0 %v367
    %406 = vmatpush.msra.mxu0 %v365
    %407 = vmatmul.f32.gmra.mxu0 %v369
    %v408 = vpop.f32.mrf.mxu0
    %v409 = vadd.f32 0.0, %v408
    %410 = vdwg.mxu0
    %s411 = scalar_lea.vmem [#allocation3], 80
    %412 = vst [vmem:[%s411] sm:$0xff] %v389
    %413 = vst [vmem:[%s411 + $0x8] sm:$0xff] %v409
    %s414 = scalar_lea.vmem [#allocation4], 48
    %v415 = vld [vmem:[%s414] sm:$0xff]
    %v416 = vld [vmem:[#allocation9] sm:$0xff]
    %v417 = vld [vmem:[#allocation9 + $0x8] sm:$0xff]
    %v418 = vld [vmem:[#allocation9 + $0x10] sm:$0xff]
    %v419 = vld [vmem:[#allocation9 + $0x18] sm:$0xff]
    %v421 = vsel %vm108, %v415, 0
    %423 = vmatpush.msra.mxu0 0.0
    %424 = vmatpush.msra.mxu0 0.0
    %425 = vmatpush.msra.mxu0 0.0
    %426 = vmatpush.msra.mxu0 0.0
    %427 = vmatpush.msra.mxu0 0.0
    %428 = vmatpush.msra.mxu0 0.0
    %429 = vmatpush.msra.mxu0 0.0
    %430 = vmatpush.msra.mxu0 0.0
    %431 = vmatpush.msra.mxu0 0.0
    %432 = vmatpush.msra.mxu0 0.0
    %433 = vmatpush.msra.mxu0 0.0
    %434 = vmatpush.msra.mxu0 0.0
    %435 = vmatpush.msra.mxu0 0.0
    %436 = vmatpush.msra.mxu0 0.0
    %437 = vmatpush.msra.mxu0 %v418
    %438 = vmatpush.msra.mxu0 %v416
    %439 = vmatmul.f32.gmra.mxu0 %v421
    %v440 = vpop.f32.mrf.mxu0
    %v441 = vadd.f32 0.0, %v440
    %442 = vdwg.mxu0
    %443 = vmatpush.msra.mxu0 0.0
    %444 = vmatpush.msra.mxu0 0.0
    %445 = vmatpush.msra.mxu0 0.0
    %446 = vmatpush.msra.mxu0 0.0
    %447 = vmatpush.msra.mxu0 0.0
    %448 = vmatpush.msra.mxu0 0.0
    %449 = vmatpush.msra.mxu0 0.0
    %450 = vmatpush.msra.mxu0 0.0
    %451 = vmatpush.msra.mxu0 0.0
    %452 = vmatpush.msra.mxu0 0.0
    %453 = vmatpush.msra.mxu0 0.0
    %454 = vmatpush.msra.mxu0 0.0
    %455 = vmatpush.msra.mxu0 0.0
    %456 = vmatpush.msra.mxu0 0.0
    %457 = vmatpush.msra.mxu0 %v419
    %458 = vmatpush.msra.mxu0 %v417
    %459 = vmatmul.f32.gmra.mxu0 %v421
    %v460 = vpop.f32.mrf.mxu0
    %v461 = vadd.f32 0.0, %v460
    %462 = vdwg.mxu0
    %s463 = scalar_lea.vmem [#allocation3], 96
    %464 = vst [vmem:[%s463] sm:$0xff] %v441
    %465 = vst [vmem:[%s463 + $0x8] sm:$0xff] %v461
    %s466 = scalar_lea.vmem [#allocation4], 56
    %v467 = vld [vmem:[%s466] sm:$0xff]
    %v468 = vld [vmem:[#allocation9] sm:$0xff]
    %v469 = vld [vmem:[#allocation9 + $0x8] sm:$0xff]
    %v470 = vld [vmem:[#allocation9 + $0x10] sm:$0xff]
    %v471 = vld [vmem:[#allocation9 + $0x18] sm:$0xff]
    %v473 = vsel %vm108, %v467, 0
    %475 = vmatpush.msra.mxu0 0.0
    %476 = vmatpush.msra.mxu0 0.0
    %477 = vmatpush.msra.mxu0 0.0
    %478 = vmatpush.msra.mxu0 0.0
    %479 = vmatpush.msra.mxu0 0.0
    %480 = vmatpush.msra.mxu0 0.0
    %481 = vmatpush.msra.mxu0 0.0
    %482 = vmatpush.msra.mxu0 0.0
    %483 = vmatpush.msra.mxu0 0.0
    %484 = vmatpush.msra.mxu0 0.0
    %485 = vmatpush.msra.mxu0 0.0
    %486 = vmatpush.msra.mxu0 0.0
    %487 = vmatpush.msra.mxu0 0.0
    %488 = vmatpush.msra.mxu0 0.0
    %489 = vmatpush.msra.mxu0 %v470
    %490 = vmatpush.msra.mxu0 %v468
    %491 = vmatmul.f32.gmra.mxu0 %v473
    %v492 = vpop.f32.mrf.mxu0
    %v493 = vadd.f32 0.0, %v492
    %494 = vdwg.mxu0
    %495 = vmatpush.msra.mxu0 0.0
    %496 = vmatpush.msra.mxu0 0.0
    %497 = vmatpush.msra.mxu0 0.0
    %498 = vmatpush.msra.mxu0 0.0
    %499 = vmatpush.msra.mxu0 0.0
    %500 = vmatpush.msra.mxu0 0.0
    %501 = vmatpush.msra.mxu0 0.0
    %502 = vmatpush.msra.mxu0 0.0
    %503 = vmatpush.msra.mxu0 0.0
    %504 = vmatpush.msra.mxu0 0.0
    %505 = vmatpush.msra.mxu0 0.0
    %506 = vmatpush.msra.mxu0 0.0
    %507 = vmatpush.msra.mxu0 0.0
    %508 = vmatpush.msra.mxu0 0.0
    %509 = vmatpush.msra.mxu0 %v471
    %510 = vmatpush.msra.mxu0 %v469
    %511 = vmatmul.f32.gmra.mxu0 %v473
    %v512 = vpop.f32.mrf.mxu0
    %v513 = vadd.f32 0.0, %v512
    %514 = vdwg.mxu0
    %s515 = scalar_lea.vmem [#allocation3], 112
    %516 = vst [vmem:[%s515] sm:$0xff] %v493
    %517 = vst [vmem:[%s515 + $0x8] sm:$0xff] %v513
    %v518 = vld [vmem:[#allocation2] sm:$0xff]
    loop: start=0, step=1, limit=8
    $region46: #{tpu_custom_call.1} parent=1 // loop_pre_header
      _
    $region47: #{tpu_custom_call.1} parent=1 // loop_header
      %s520 = sphi 0, %s524
      %p521 = scmp.ge.s32.totalorder %s520, 8
      %v525 = vphi %v518, %v1028
    $region48: #{tpu_custom_call.1} parent=1 // loop_header_branch
      %523 = sbr.rel (%p521) target = $region52
    $region49: #{tpu_custom_call.1} parent=1 // loop_body
      %s526 = smul.u32 %s520, 2
      %s527 = smul.addr %s526, 8
      %s528 = scalar_lea.vmem [#allocation3], %s527
      %v529 = vld [vmem:[%s528] sm:$0xff]
      %v530 = vld [vmem:[%s528 + $0x8] sm:$0xff]
      %v531 = vld [vmem:[#allocation10] sm:$0xff]
      %v532 = vld [vmem:[#allocation10 + $0x8] sm:$0xff]
      %v533 = vld [vmem:[#allocation10 + $0x10] sm:$0xff]
      %v534 = vld [vmem:[#allocation10 + $0x18] sm:$0xff]
      %v535 = vld [vmem:[#allocation10 + $0x20] sm:$0xff]
      %v536 = vld [vmem:[#allocation10 + $0x28] sm:$0xff]
      %v537 = vld [vmem:[#allocation10 + $0x30] sm:$0xff]
      %v538 = vld [vmem:[#allocation10 + $0x38] sm:$0xff]
      %v539 = vld [vmem:[#allocation10 + $0x40] sm:$0xff]
      %v540 = vld [vmem:[#allocation10 + $0x48] sm:$0xff]
      %v541 = vld [vmem:[#allocation10 + $0x50] sm:$0xff]
      %v542 = vld [vmem:[#allocation10 + $0x58] sm:$0xff]
      %v543 = vld [vmem:[#allocation10 + $0x60] sm:$0xff]
      %v544 = vld [vmem:[#allocation10 + $0x68] sm:$0xff]
      %v545 = vld [vmem:[#allocation10 + $0x70] sm:$0xff]
      %v546 = vld [vmem:[#allocation10 + $0x78] sm:$0xff]
      %v547 = vld [vmem:[#allocation10 + $0x80] sm:$0xff]
      %v548 = vld [vmem:[#allocation10 + $0x88] sm:$0xff]
      %v549 = vld [vmem:[#allocation10 + $0x90] sm:$0xff]
      %v550 = vld [vmem:[#allocation10 + $0x98] sm:$0xff]
      %v551 = vld [vmem:[#allocation10 + $0xa0] sm:$0xff]
      %v552 = vld [vmem:[#allocation10 + $0xa8] sm:$0xff]
      %v553 = vld [vmem:[#allocation10 + $0xb0] sm:$0xff]
      %v554 = vld [vmem:[#allocation10 + $0xb8] sm:$0xff]
      %v555 = vld [vmem:[#allocation10 + $0xc0] sm:$0xff]
      %v556 = vld [vmem:[#allocation10 + $0xc8] sm:$0xff]
      %v557 = vld [vmem:[#allocation10 + $0xd0] sm:$0xff]
      %v558 = vld [vmem:[#allocation10 + $0xd8] sm:$0xff]
      %v559 = vld [vmem:[#allocation10 + $0xe0] sm:$0xff]
      %v560 = vld [vmem:[#allocation10 + $0xe8] sm:$0xff]
      %v561 = vld [vmem:[#allocation10 + $0xf0] sm:$0xff]
      %v562 = vld [vmem:[#allocation10 + $0xf8] sm:$0xff]
      %563 = vmatpush.msra.mxu0 %v561
      %564 = vmatpush.msra.mxu0 %v559
      %565 = vmatpush.msra.mxu0 %v557
      %566 = vmatpush.msra.mxu0 %v555
      %567 = vmatpush.msra.mxu0 %v553
      %568 = vmatpush.msra.mxu0 %v551
      %569 = vmatpush.msra.mxu0 %v549
      %570 = vmatpush.msra.mxu0 %v547
      %571 = vmatpush.msra.mxu0 %v545
      %572 = vmatpush.msra.mxu0 %v543
      %573 = vmatpush.msra.mxu0 %v541
      %574 = vmatpush.msra.mxu0 %v539
      %575 = vmatpush.msra.mxu0 %v537
      %576 = vmatpush.msra.mxu0 %v535
      %577 = vmatpush.msra.mxu0 %v533
      %578 = vmatpush.msra.mxu0 %v531
      %579 = vmatmul.f32.gmra.mxu0 %v525
      %v580 = vpop.f32.mrf.mxu0
      %v581 = vadd.f32 0.0, %v580
      %582 = vdwg.mxu0
      %583 = vmatpush.msra.mxu0 %v562
      %584 = vmatpush.msra.mxu0 %v560
      %585 = vmatpush.msra.mxu0 %v558
      %586 = vmatpush.msra.mxu0 %v556
      %587 = vmatpush.msra.mxu0 %v554
      %588 = vmatpush.msra.mxu0 %v552
      %589 = vmatpush.msra.mxu0 %v550
      %590 = vmatpush.msra.mxu0 %v548
      %591 = vmatpush.msra.mxu0 %v546
      %592 = vmatpush.msra.mxu0 %v544
      %593 = vmatpush.msra.mxu0 %v542
      %594 = vmatpush.msra.mxu0 %v540
      %595 = vmatpush.msra.mxu0 %v538
      %596 = vmatpush.msra.mxu0 %v536
      %597 = vmatpush.msra.mxu0 %v534
      %598 = vmatpush.msra.mxu0 %v532
      %599 = vmatmul.f32.gmra.mxu0 %v525
      %v600 = vpop.f32.mrf.mxu0
      %v601 = vadd.f32 0.0, %v600
      %602 = vdwg.mxu0
      %v603 = vadd.f32 %v529, %v581
      %v604 = vadd.f32 %v530, %v601
      %v605 = vxor.u32 %v603, 2147483648
      %v606 = vmul.f32 %v605, 1.442695
      %v607 = vpow.pop %v606
      %v608 = vadd.f32 %v607, 1.0
      %v609 = vrcp.pop %v608
      %v610 = vmul.f32 %v608, %v609
      %v611 = vsub.f32 1.0, %v610
      %v612 = vmul.f32 %v609, %v611
      %v613 = vadd.f32 %v609, %v612
      %vm614 = vweird.f32 %v608
      %vm615 = vweird.f32 %v609
      %vm616 = vmor %vm614, %vm615
      %v617 = vsel %vm616, %v609, %v613
      %v618 = vand.u32 2147483647, %v608
      %vm619 = vcmp.eq.f32.partialorder %v618, 8.507059e+37
      %v620 = vand.u32 %v608, 2147483648
      %v621 = vor.u32 1.1754944e-38, %v620
      %v622 = vsel %vm619, %v621, %v617
      %v623 = vmul.f32 1.0, %v622
      %v624 = vtanh.pop %v604
      %v625 = vsub.f32 %v624, %v525
      %v626 = vmul.f32 %v623, %v625
      %v627 = vadd.f32 %v525, %v626
      %v628 = vld [vmem:[#allocation12] sm:$0xff]
      %v629 = vld [vmem:[#allocation12 + $0x8] sm:$0xff]
      %v630 = vld [vmem:[#allocation12 + $0x40] sm:$0xff]
      %v631 = vld [vmem:[#allocation12 + $0x48] sm:$0xff]
      %v632 = vld [vmem:[#allocation12 + $0x80] sm:$0xff]
      %v633 = vld [vmem:[#allocation12 + $0x88] sm:$0xff]
      %v634 = vld [vmem:[#allocation12 + $0xc0] sm:$0xff]
      %v635 = vld [vmem:[#allocation12 + $0xc8] sm:$0xff]
      %v636 = vld [vmem:[#allocation12 + $0x100] sm:$0xff]
      %v637 = vld [vmem:[#allocation12 + $0x108] sm:$0xff]
      %v638 = vld [vmem:[#allocation12 + $0x140] sm:$0xff]
      %v639 = vld [vmem:[#allocation12 + $0x148] sm:$0xff]
      %v640 = vld [vmem:[#allocation12 + $0x180] sm:$0xff]
      %v641 = vld [vmem:[#allocation12 + $0x188] sm:$0xff]
      %v642 = vld [vmem:[#allocation12 + $0x1c0] sm:$0xff]
      %v643 = vld [vmem:[#allocation12 + $0x1c8] sm:$0xff]
      %v644 = vld [vmem:[#allocation12 + $0x200] sm:$0xff]
      %v645 = vld [vmem:[#allocation12 + $0x208] sm:$0xff]
      %v646 = vld [vmem:[#allocation12 + $0x240] sm:$0xff]
      %v647 = vld [vmem:[#allocation12 + $0x248] sm:$0xff]
      %v648 = vld [vmem:[#allocation12 + $0x280] sm:$0xff]
      %v649 = vld [vmem:[#allocation12 + $0x288] sm:$0xff]
      %v650 = vld [vmem:[#allocation12 + $0x2c0] sm:$0xff]
      %v651 = vld [vmem:[#allocation12 + $0x2c8] sm:$0xff]
      %v652 = vld [vmem:[#allocation12 + $0x300] sm:$0xff]
      %v653 = vld [vmem:[#allocation12 + $0x308] sm:$0xff]
      %v654 = vld [vmem:[#allocation12 + $0x340] sm:$0xff]
      %v655 = vld [vmem:[#allocation12 + $0x348] sm:$0xff]
      %v656 = vld [vmem:[#allocation12 + $0x380] sm:$0xff]
      %v657 = vld [vmem:[#allocation12 + $0x388] sm:$0xff]
      %v658 = vld [vmem:[#allocation12 + $0x3c0] sm:$0xff]
      %v659 = vld [vmem:[#allocation12 + $0x3c8] sm:$0xff]
      %660 = vmatpush.msra.mxu0 %v658
      %661 = vmatpush.msra.mxu0 %v656
      %662 = vmatpush.msra.mxu0 %v654
      %663 = vmatpush.msra.mxu0 %v652
      %664 = vmatpush.msra.mxu0 %v650
      %665 = vmatpush.msra.mxu0 %v648
      %666 = vmatpush.msra.mxu0 %v646
      %667 = vmatpush.msra.mxu0 %v644
      %668 = vmatpush.msra.mxu0 %v642
      %669 = vmatpush.msra.mxu0 %v640
      %670 = vmatpush.msra.mxu0 %v638
      %671 = vmatpush.msra.mxu0 %v636
      %672 = vmatpush.msra.mxu0 %v634
      %673 = vmatpush.msra.mxu0 %v632
      %674 = vmatpush.msra.mxu0 %v630
      %675 = vmatpush.msra.mxu0 %v628
      %676 = vmatmul.f32.gmra.mxu0 %v627
      %v677 = vpop.f32.mrf.mxu0
      %v678 = vadd.f32 0.0, %v677
      %679 = vdwg.mxu0
      %680 = vmatpush.msra.mxu0 %v659
      %681 = vmatpush.msra.mxu0 %v657
      %682 = vmatpush.msra.mxu0 %v655
      %683 = vmatpush.msra.mxu0 %v653
      %684 = vmatpush.msra.mxu0 %v651
      %685 = vmatpush.msra.mxu0 %v649
      %686 = vmatpush.msra.mxu0 %v647
      %687 = vmatpush.msra.mxu0 %v645
      %688 = vmatpush.msra.mxu0 %v643
      %689 = vmatpush.msra.mxu0 %v641
      %690 = vmatpush.msra.mxu0 %v639
      %691 = vmatpush.msra.mxu0 %v637
      %692 = vmatpush.msra.mxu0 %v635
      %693 = vmatpush.msra.mxu0 %v633
      %694 = vmatpush.msra.mxu0 %v631
      %695 = vmatpush.msra.mxu0 %v629
      %696 = vmatmul.f32.gmra.mxu0 %v627
      %v697 = vpop.f32.mrf.mxu0
      %v698 = vadd.f32 0.0, %v697
      %699 = vdwg.mxu0
      %v700 = vxor.u32 %v678, 2147483648
      %v701 = vmul.f32 %v700, 1.442695
      %v702 = vpow.pop %v701
      %v703 = vadd.f32 %v702, 1.0
      %v704 = vrcp.pop %v703
      %v705 = vmul.f32 %v703, %v704
      %v706 = vsub.f32 1.0, %v705
      %v707 = vmul.f32 %v704, %v706
      %v708 = vadd.f32 %v704, %v707
      %vm709 = vweird.f32 %v703
      %vm710 = vweird.f32 %v704
      %vm711 = vmor %vm709, %vm710
      %v712 = vsel %vm711, %v704, %v708
      %v713 = vand.u32 2147483647, %v703
      %vm714 = vcmp.eq.f32.partialorder %v713, 8.507059e+37
      %v715 = vand.u32 %v703, 2147483648
      %v716 = vor.u32 1.1754944e-38, %v715
      %v717 = vsel %vm714, %v716, %v712
      %v718 = vmul.f32 1.0, %v717
      %v719 = vtanh.pop %v698
      %v720 = vsub.f32 %v719, %v627
      %v721 = vmul.f32 %v718, %v720
      %v722 = vadd.f32 %v627, %v721
      %v723 = vld [vmem:[#allocation12 + $0x10] sm:$0xff]
      %v724 = vld [vmem:[#allocation12 + $0x18] sm:$0xff]
      %v725 = vld [vmem:[#allocation12 + $0x20] sm:$0xff]
      %v726 = vld [vmem:[#allocation12 + $0x28] sm:$0xff]
      %v727 = vld [vmem:[#allocation12 + $0x50] sm:$0xff]
      %v728 = vld [vmem:[#allocation12 + $0x58] sm:$0xff]
      %v729 = vld [vmem:[#allocation12 + $0x60] sm:$0xff]
      %v730 = vld [vmem:[#allocation12 + $0x68] sm:$0xff]
      %v731 = vld [vmem:[#allocation12 + $0x90] sm:$0xff]
      %v732 = vld [vmem:[#allocation12 + $0x98] sm:$0xff]
      %v733 = vld [vmem:[#allocation12 + $0xa0] sm:$0xff]
      %v734 = vld [vmem:[#allocation12 + $0xa8] sm:$0xff]
      %v735 = vld [vmem:[#allocation12 + $0xd0] sm:$0xff]
      %v736 = vld [vmem:[#allocation12 + $0xd8] sm:$0xff]
      %v737 = vld [vmem:[#allocation12 + $0xe0] sm:$0xff]
      %v738 = vld [vmem:[#allocation12 + $0xe8] sm:$0xff]
      %v739 = vld [vmem:[#allocation12 + $0x110] sm:$0xff]
      %v740 = vld [vmem:[#allocation12 + $0x118] sm:$0xff]
      %v741 = vld [vmem:[#allocation12 + $0x120] sm:$0xff]
      %v742 = vld [vmem:[#allocation12 + $0x128] sm:$0xff]
      %v743 = vld [vmem:[#allocation12 + $0x150] sm:$0xff]
      %v744 = vld [vmem:[#allocation12 + $0x158] sm:$0xff]
      %v745 = vld [vmem:[#allocation12 + $0x160] sm:$0xff]
      %v746 = vld [vmem:[#allocation12 + $0x168] sm:$0xff]
      %v747 = vld [vmem:[#allocation12 + $0x190] sm:$0xff]
      %v748 = vld [vmem:[#allocation12 + $0x198] sm:$0xff]
      %v749 = vld [vmem:[#allocation12 + $0x1a0] sm:$0xff]
      %v750 = vld [vmem:[#allocation12 + $0x1a8] sm:$0xff]
      %v751 = vld [vmem:[#allocation12 + $0x1d0] sm:$0xff]
      %v752 = vld [vmem:[#allocation12 + $0x1d8] sm:$0xff]
      %v753 = vld [vmem:[#allocation12 + $0x1e0] sm:$0xff]
      %v754 = vld [vmem:[#allocation12 + $0x1e8] sm:$0xff]
      %v755 = vld [vmem:[#allocation12 + $0x210] sm:$0xff]
      %v756 = vld [vmem:[#allocation12 + $0x218] sm:$0xff]
      %v757 = vld [vmem:[#allocation12 + $0x220] sm:$0xff]
      %v758 = vld [vmem:[#allocation12 + $0x228] sm:$0xff]
      %v759 = vld [vmem:[#allocation12 + $0x250] sm:$0xff]
      %v760 = vld [vmem:[#allocation12 + $0x258] sm:$0xff]
      %v761 = vld [vmem:[#allocation12 + $0x260] sm:$0xff]
      %v762 = vld [vmem:[#allocation12 + $0x268] sm:$0xff]
      %v763 = vld [vmem:[#allocation12 + $0x290] sm:$0xff]
      %v764 = vld [vmem:[#allocation12 + $0x298] sm:$0xff]
      %v765 = vld [vmem:[#allocation12 + $0x2a0] sm:$0xff]
      %v766 = vld [vmem:[#allocation12 + $0x2a8] sm:$0xff]
      %v767 = vld [vmem:[#allocation12 + $0x2d0] sm:$0xff]
      %v768 = vld [vmem:[#allocation12 + $0x2d8] sm:$0xff]
      %v769 = vld [vmem:[#allocation12 + $0x2e0] sm:$0xff]
      %v770 = vld [vmem:[#allocation12 + $0x2e8] sm:$0xff]
      %v771 = vld [vmem:[#allocation12 + $0x310] sm:$0xff]
      %v772 = vld [vmem:[#allocation12 + $0x318] sm:$0xff]
      %v773 = vld [vmem:[#allocation12 + $0x320] sm:$0xff]
      %v774 = vld [vmem:[#allocation12 + $0x328] sm:$0xff]
      %v775 = vld [vmem:[#allocation12 + $0x350] sm:$0xff]
      %v776 = vld [vmem:[#allocation12 + $0x358] sm:$0xff]
      %v777 = vld [vmem:[#allocation12 + $0x360] sm:$0xff]
      %v778 = vld [vmem:[#allocation12 + $0x368] sm:$0xff]
      %v779 = vld [vmem:[#allocation12 + $0x390] sm:$0xff]
      %v780 = vld [vmem:[#allocation12 + $0x398] sm:$0xff]
      %v781 = vld [vmem:[#allocation12 + $0x3a0] sm:$0xff]
      %v782 = vld [vmem:[#allocation12 + $0x3a8] sm:$0xff]
      %v783 = vld [vmem:[#allocation12 + $0x3d0] sm:$0xff]
      %v784 = vld [vmem:[#allocation12 + $0x3d8] sm:$0xff]
      %v785 = vld [vmem:[#allocation12 + $0x3e0] sm:$0xff]
      %v786 = vld [vmem:[#allocation12 + $0x3e8] sm:$0xff]
      %787 = vmatpush.msra.mxu0 %v783
      %788 = vmatpush.msra.mxu0 %v779
      %789 = vmatpush.msra.mxu0 %v775
      %790 = vmatpush.msra.mxu0 %v771
      %791 = vmatpush.msra.mxu0 %v767
      %792 = vmatpush.msra.mxu0 %v763
      %793 = vmatpush.msra.mxu0 %v759
      %794 = vmatpush.msra.mxu0 %v755
      %795 = vmatpush.msra.mxu0 %v751
      %796 = vmatpush.msra.mxu0 %v747
      %797 = vmatpush.msra.mxu0 %v743
      %798 = vmatpush.msra.mxu0 %v739
      %799 = vmatpush.msra.mxu0 %v735
      %800 = vmatpush.msra.mxu0 %v731
      %801 = vmatpush.msra.mxu0 %v727
      %802 = vmatpush.msra.mxu0 %v723
      %803 = vmatmul.f32.gmra.mxu0 %v722
      %v804 = vpop.f32.mrf.mxu0
      %v805 = vadd.f32 0.0, %v804
      %806 = vdwg.mxu0
      %807 = vmatpush.msra.mxu0 %v784
      %808 = vmatpush.msra.mxu0 %v780
      %809 = vmatpush.msra.mxu0 %v776
      %810 = vmatpush.msra.mxu0 %v772
      %811 = vmatpush.msra.mxu0 %v768
      %812 = vmatpush.msra.mxu0 %v764
      %813 = vmatpush.msra.mxu0 %v760
      %814 = vmatpush.msra.mxu0 %v756
      %815 = vmatpush.msra.mxu0 %v752
      %816 = vmatpush.msra.mxu0 %v748
      %817 = vmatpush.msra.mxu0 %v744
      %818 = vmatpush.msra.mxu0 %v740
      %819 = vmatpush.msra.mxu0 %v736
      %820 = vmatpush.msra.mxu0 %v732
      %821 = vmatpush.msra.mxu0 %v728
      %822 = vmatpush.msra.mxu0 %v724
      %823 = vmatmul.f32.gmra.mxu0 %v722
      %v824 = vpop.f32.mrf.mxu0
      %v825 = vadd.f32 0.0, %v824
      %826 = vdwg.mxu0
      %827 = vmatpush.msra.mxu0 %v785
      %828 = vmatpush.msra.mxu0 %v781
      %829 = vmatpush.msra.mxu0 %v777
      %830 = vmatpush.msra.mxu0 %v773
      %831 = vmatpush.msra.mxu0 %v769
      %832 = vmatpush.msra.mxu0 %v765
      %833 = vmatpush.msra.mxu0 %v761
      %834 = vmatpush.msra.mxu0 %v757
      %835 = vmatpush.msra.mxu0 %v753
      %836 = vmatpush.msra.mxu0 %v749
      %837 = vmatpush.msra.mxu0 %v745
      %838 = vmatpush.msra.mxu0 %v741
      %839 = vmatpush.msra.mxu0 %v737
      %840 = vmatpush.msra.mxu0 %v733
      %841 = vmatpush.msra.mxu0 %v729
      %842 = vmatpush.msra.mxu0 %v725
      %843 = vmatmul.f32.gmra.mxu0 %v722
      %v844 = vpop.f32.mrf.mxu0
      %v845 = vadd.f32 0.0, %v844
      %846 = vdwg.mxu0
      %847 = vmatpush.msra.mxu0 %v786
      %848 = vmatpush.msra.mxu0 %v782
      %849 = vmatpush.msra.mxu0 %v778
      %850 = vmatpush.msra.mxu0 %v774
      %851 = vmatpush.msra.mxu0 %v770
      %852 = vmatpush.msra.mxu0 %v766
      %853 = vmatpush.msra.mxu0 %v762
      %854 = vmatpush.msra.mxu0 %v758
      %855 = vmatpush.msra.mxu0 %v754
      %856 = vmatpush.msra.mxu0 %v750
      %857 = vmatpush.msra.mxu0 %v746
      %858 = vmatpush.msra.mxu0 %v742
      %859 = vmatpush.msra.mxu0 %v738
      %860 = vmatpush.msra.mxu0 %v734
      %861 = vmatpush.msra.mxu0 %v730
      %862 = vmatpush.msra.mxu0 %v726
      %863 = vmatmul.f32.gmra.mxu0 %v722
      %v864 = vpop.f32.mrf.mxu0
      %v865 = vadd.f32 0.0, %v864
      %866 = vdwg.mxu0
      %v867 = vxor.u32 %v805, 2147483648
      %v868 = vmul.f32 %v867, 1.442695
      %v869 = vpow.pop %v868
      %v870 = vadd.f32 %v869, 1.0
      %v871 = vrcp.pop %v870
      %v872 = vmul.f32 %v870, %v871
      %v873 = vsub.f32 1.0, %v872
      %v874 = vmul.f32 %v871, %v873
      %v875 = vadd.f32 %v871, %v874
      %vm876 = vweird.f32 %v870
      %vm877 = vweird.f32 %v871
      %vm878 = vmor %vm876, %vm877
      %v879 = vsel %vm878, %v871, %v875
      %v880 = vand.u32 2147483647, %v870
      %vm881 = vcmp.eq.f32.partialorder %v880, 8.507059e+37
      %v882 = vand.u32 %v870, 2147483648
      %v883 = vor.u32 1.1754944e-38, %v882
      %v884 = vsel %vm881, %v883, %v879
      %v885 = vmul.f32 1.0, %v884
      %v886 = vmax.f32 %v825, 0.0
      %v887 = vsub.f32 %v886, %v722
      %v888 = vmul.f32 %v885, %v887
      %v889 = vadd.f32 %v722, %v888
      %v890 = vxor.u32 %v845, 2147483648
      %v891 = vmul.f32 %v890, 1.442695
      %v892 = vpow.pop %v891
      %v893 = vadd.f32 %v892, 1.0
      %v894 = vrcp.pop %v893
      %v895 = vmul.f32 %v893, %v894
      %v896 = vsub.f32 1.0, %v895
      %v897 = vmul.f32 %v894, %v896
      %v898 = vadd.f32 %v894, %v897
      %vm899 = vweird.f32 %v893
      %vm900 = vweird.f32 %v894
      %vm901 = vmor %vm899, %vm900
      %v902 = vsel %vm901, %v894, %v898
      %v903 = vand.u32 2147483647, %v893
      %vm904 = vcmp.eq.f32.partialorder %v903, 8.507059e+37
      %v905 = vand.u32 %v893, 2147483648
      %v906 = vor.u32 1.1754944e-38, %v905
      %v907 = vsel %vm904, %v906, %v902
      %v908 = vmul.f32 1.0, %v907
      %v909 = vxor.u32 %v865, 2147483648
      %v910 = vmul.f32 %v909, 1.442695
      %v911 = vpow.pop %v910
      %v912 = vadd.f32 %v911, 1.0
      %v913 = vrcp.pop %v912
      %v914 = vmul.f32 %v912, %v913
      %v915 = vsub.f32 1.0, %v914
      %v916 = vmul.f32 %v913, %v915
      %v917 = vadd.f32 %v913, %v916
      %vm918 = vweird.f32 %v912
      %vm919 = vweird.f32 %v913
      %vm920 = vmor %vm918, %vm919
      %v921 = vsel %vm920, %v913, %v917
      %v922 = vand.u32 2147483647, %v912
      %vm923 = vcmp.eq.f32.partialorder %v922, 8.507059e+37
      %v924 = vand.u32 %v912, 2147483648
      %v925 = vor.u32 1.1754944e-38, %v924
      %v926 = vsel %vm923, %v925, %v921
      %v927 = vmul.f32 1.0, %v926
      %v928 = vsub.f32 %v927, %v722
      %v929 = vmul.f32 %v908, %v928
      %v930 = vadd.f32 %v722, %v929
      %v931 = vld [vmem:[#allocation12 + $0x30] sm:$0xff]
      %v932 = vld [vmem:[#allocation12 + $0x38] sm:$0xff]
      %v933 = vld [vmem:[#allocation12 + $0x70] sm:$0xff]
      %v934 = vld [vmem:[#allocation12 + $0x78] sm:$0xff]
      %v935 = vld [vmem:[#allocation12 + $0xb0] sm:$0xff]
      %v936 = vld [vmem:[#allocation12 + $0xb8] sm:$0xff]
      %v937 = vld [vmem:[#allocation12 + $0xf0] sm:$0xff]
      %v938 = vld [vmem:[#allocation12 + $0xf8] sm:$0xff]
      %v939 = vld [vmem:[#allocation12 + $0x130] sm:$0xff]
      %v940 = vld [vmem:[#allocation12 + $0x138] sm:$0xff]
      %v941 = vld [vmem:[#allocation12 + $0x170] sm:$0xff]
      %v942 = vld [vmem:[#allocation12 + $0x178] sm:$0xff]
      %v943 = vld [vmem:[#allocation12 + $0x1b0] sm:$0xff]
      %v944 = vld [vmem:[#allocation12 + $0x1b8] sm:$0xff]
      %v945 = vld [vmem:[#allocation12 + $0x1f0] sm:$0xff]
      %v946 = vld [vmem:[#allocation12 + $0x1f8] sm:$0xff]
      %v947 = vld [vmem:[#allocation12 + $0x230] sm:$0xff]
      %v948 = vld [vmem:[#allocation12 + $0x238] sm:$0xff]
      %v949 = vld [vmem:[#allocation12 + $0x270] sm:$0xff]
      %v950 = vld [vmem:[#allocation12 + $0x278] sm:$0xff]
      %v951 = vld [vmem:[#allocation12 + $0x2b0] sm:$0xff]
      %v952 = vld [vmem:[#allocation12 + $0x2b8] sm:$0xff]
      %v953 = vld [vmem:[#allocation12 + $0x2f0] sm:$0xff]
      %v954 = vld [vmem:[#allocation12 + $0x2f8] sm:$0xff]
      %v955 = vld [vmem:[#allocation12 + $0x330] sm:$0xff]
      %v956 = vld [vmem:[#allocation12 + $0x338] sm:$0xff]
      %v957 = vld [vmem:[#allocation12 + $0x370] sm:$0xff]
      %v958 = vld [vmem:[#allocation12 + $0x378] sm:$0xff]
      %v959 = vld [vmem:[#allocation12 + $0x3b0] sm:$0xff]
      %v960 = vld [vmem:[#allocation12 + $0x3b8] sm:$0xff]
      %v961 = vld [vmem:[#allocation12 + $0x3f0] sm:$0xff]
      %v962 = vld [vmem:[#allocation12 + $0x3f8] sm:$0xff]
      %963 = vmatpush.msra.mxu0 %v961
      %964 = vmatpush.msra.mxu0 %v959
      %965 = vmatpush.msra.mxu0 %v957
      %966 = vmatpush.msra.mxu0 %v955
      %967 = vmatpush.msra.mxu0 %v953
      %968 = vmatpush.msra.mxu0 %v951
      %969 = vmatpush.msra.mxu0 %v949
      %970 = vmatpush.msra.mxu0 %v947
      %971 = vmatpush.msra.mxu0 %v945
      %972 = vmatpush.msra.mxu0 %v943
      %973 = vmatpush.msra.mxu0 %v941
      %974 = vmatpush.msra.mxu0 %v939
      %975 = vmatpush.msra.mxu0 %v937
      %976 = vmatpush.msra.mxu0 %v935
      %977 = vmatpush.msra.mxu0 %v933
      %978 = vmatpush.msra.mxu0 %v931
      %979 = vmatmul.f32.gmra.mxu0 %v889
      %v980 = vpop.f32.mrf.mxu0
      %v981 = vadd.f32 0.0, %v980
      %982 = vdwg.mxu0
      %983 = vmatpush.msra.mxu0 %v962
      %984 = vmatpush.msra.mxu0 %v960
      %985 = vmatpush.msra.mxu0 %v958
      %986 = vmatpush.msra.mxu0 %v956
      %987 = vmatpush.msra.mxu0 %v954
      %988 = vmatpush.msra.mxu0 %v952
      %989 = vmatpush.msra.mxu0 %v950
      %990 = vmatpush.msra.mxu0 %v948
      %991 = vmatpush.msra.mxu0 %v946
      %992 = vmatpush.msra.mxu0 %v944
      %993 = vmatpush.msra.mxu0 %v942
      %994 = vmatpush.msra.mxu0 %v940
      %995 = vmatpush.msra.mxu0 %v938
      %996 = vmatpush.msra.mxu0 %v936
      %997 = vmatpush.msra.mxu0 %v934
      %998 = vmatpush.msra.mxu0 %v932
      %999 = vmatmul.f32.gmra.mxu0 %v889
      %v1000 = vpop.f32.mrf.mxu0
      %v1001 = vadd.f32 0.0, %v1000
      %1002 = vdwg.mxu0
      %v1003 = vxor.u32 %v981, 2147483648
      %v1004 = vmul.f32 %v1003, 1.442695
      %v1005 = vpow.pop %v1004
      %v1006 = vadd.f32 %v1005, 1.0
      %v1007 = vrcp.pop %v1006
      %v1008 = vmul.f32 %v1006, %v1007
      %v1009 = vsub.f32 1.0, %v1008
      %v1010 = vmul.f32 %v1007, %v1009
      %v1011 = vadd.f32 %v1007, %v1010
      %vm1012 = vweird.f32 %v1006
      %vm1013 = vweird.f32 %v1007
      %vm1014 = vmor %vm1012, %vm1013
      %v1015 = vsel %vm1014, %v1007, %v1011
      %v1016 = vand.u32 2147483647, %v1006
      %vm1017 = vcmp.eq.f32.partialorder %v1016, 8.507059e+37
      %v1018 = vand.u32 %v1006, 2147483648
      %v1019 = vor.u32 1.1754944e-38, %v1018
      %v1020 = vsel %vm1017, %v1019, %v1015
      %v1021 = vmul.f32 1.0, %v1020
      %v1022 = vsub.f32 %v1001, %v889
      %v1023 = vmul.f32 %v1021, %v1022
      %v1024 = vadd.f32 %v889, %v1023
      %v1025 = vadd.f32 %v722, %v889
      %v1026 = vadd.f32 %v1025, %v930
      %v1027 = vadd.f32 %v1026, %v1024
      %v1028 = vmul.f32 %v1027, 0.25
      %s1029 = smul.u32 %s520, 8
      %s1030 = scalar_lea.vmem [#allocation13], %s1029
      %1031 = vst [vmem:[%s1030] sm:$0xff] %v1028
    $region50: #{tpu_custom_call.1} parent=1 // loop_footer
      %s524 = sadd.s32 1, %s520
    $region51: #{tpu_custom_call.1} parent=1 // loop_footer_branch
      %519 = sbr.rel target = $region47
    $region52: #{tpu_custom_call.1} parent=1 // loop_exit
      _
    %1032 = vst [vmem:[#allocation2] sm:$0xff] %v525
    // Predicated region
    $region53: #{tpu_custom_call.1} parent=1 // pred_check
      _
    $region54: #{tpu_custom_call.1} parent=1 // pred_check_branch
      %1034 = sbr.rel (0) target = $region56
    $region55: #{tpu_custom_call.1} parent=1 // pred_region
      %1036 = vsyncadd [#allocation6], 0
      %s1037 = sshll.u32 [#allocation13], 4
      %s1038 = int_to_ptr.vmem [resolvable:$true] %s1037
      %s1039 = sshll.u32 %s5, 4
      %s1040 = int_to_ptr.hbm [resolvable:$true] %s1039
      %1045 = dma.vmem_to_hbm [thread:$0]  %s1038, 1024, %s1040, [#allocation6], 128, 128, 8
    $region56: #{tpu_custom_call.1} parent=1 // pred_fallthru
      _
    // Predicated region
    $region57: #{tpu_custom_call.1} parent=1 // pred_check
      _
    $region58: #{tpu_custom_call.1} parent=1 // pred_check_branch
      %1047 = sbr.rel (0) target = $region60
    $region59: #{tpu_custom_call.1} parent=1 // pred_region
      %1049 = dma.done [#allocation6], 1024
    $region60: #{tpu_custom_call.1} parent=1 // pred_fallthru
      _
    %1050 = vsyncpa [#allocation5], 1
    %1051 = vsyncpa [#allocation8], 1
    %1052 = vsyncpa [#allocation11], 1
    %1053 = vsyncpa [#allocation6], 1

</llo_original>
